<compile_context>
chip_gen: v6e
topology: v6e:2x2x1
jax: 0.10.0
libtpu: 0.0.40
codegen_flags: <defaults>
</compile_context>

<pallas_src>
import numpy as np
import jax
import jax.numpy as jnp
from jax.experimental import pallas as pl
from jax.experimental.pallas import tpu as pltpu


def _patch_merge_kernel(x_ref, o_ref):
    # x_ref: (R, 2, Wh, 2C)  -- R merged-row pairs; axis 1 = ki (top/bottom image row);
    #                           lanes pack (kj, c) as kj*C + c.
    # o_ref: (R, Wh, 4C)     -- channel-major merged patches: lane = c*4 + ki*2 + kj.
    r, _, wh, two_c = x_ref.shape
    c_dim = two_c // 2
    four_c = o_ref.shape[-1]

    # ki planes; leading-dim-only reshape (last dim untouched) -> free layout-wise.
    a = x_ref[:, 0].reshape(r * wh, two_c)   # ki = 0 rows, lane = kj*C + c
    b = x_ref[:, 1].reshape(r * wh, two_c)   # ki = 1 rows

    # One-hot riffle matrices, built in-register from iota (never shipped from HBM):
    #   Pa[k, n] = 1 iff n == 4*c + kj        (ki = 0 -> p = kj)
    #   Pb[k, n] = 1 iff n == 4*c + kj + 2    (ki = 1 -> p = 2 + kj)
    # where k = kj*C + c.  Integer div/mod avoided (kj = k >= C, c = k - kj*C).
    k_idx = jax.lax.broadcasted_iota(jnp.int32, (two_c, four_c), 0)
    n_idx = jax.lax.broadcasted_iota(jnp.int32, (two_c, four_c), 1)
    kj = (k_idx >= c_dim).astype(jnp.int32)
    c = k_idx - kj * c_dim
    pa = (n_idx == 4 * c + kj).astype(x_ref.dtype)
    pb = (n_idx == 4 * c + kj + 2).astype(x_ref.dtype)

    # Each output element receives exactly one input element (0/1 matrix), so the contraction
    # is a pure data rearrangement; HIGHEST precision keeps it exact for f32 inputs as well.
    out = (jnp.dot(a, pa, preferred_element_type=jnp.float32,
                   precision=jax.lax.Precision.HIGHEST)
           + jnp.dot(b, pb, preferred_element_type=jnp.float32,
                     precision=jax.lax.Precision.HIGHEST))

    # Leading-dim-only reshape back; single full-width, lane-dense store (no masked partials).
    o_ref[...] = out.reshape(r, wh, four_c).astype(o_ref.dtype)


def _block_params():
    """(target bytes per output block, vmem_limit_bytes) tuned per TPU generation."""
    try:
        kind = jax.devices()[0].device_kind.lower()
    except Exception:  # pragma: no cover - defensive; default is safe everywhere
        kind = ""
    if "v5 lite" in kind or "v5e" in kind or "v5litepod" in kind:
        # v5e is HBM-bound already at ~2 MiB blocks; don't chase block size.
        return 2 << 20, 32 << 20
    # v6e / v7x: larger blocks amortize the ~0.35 us per-grid-step overhead.
    # 4 MiB in + 4 MiB out, double buffered ~= 16 MiB << 48 MiB (headroom under v7x's 64 MiB).
    return 4 << 20, 48 << 20


def patch_merge(x, img_size):
    """Pallas implementation of PatchMerge.forward (2x2 unfold, stride 2, channel-major)."""
    B, N, C = x.shape
    H = W = img_size
    assert N == H * W and H % 2 == 0 and W % 2 == 0
    Hh, Wh = H // 2, W // 2
    M = B * Hh                                      # total merged rows across the batch

    target_block_bytes, vmem_limit = _block_params()
    row_bytes = Wh * 4 * C * x.dtype.itemsize       # one merged output row == one input row-pair
    # Ragged cdiv-based grid: R is the VMEM-optimal row count, not a divisor of M.
    R = max(1, min(M, target_block_bytes // max(row_bytes, 1)))
    if M > 1:
        # Keep >= 2 grid steps so the "parallel" axis can be split across both TensorCores
        # (only shrinks R when the whole problem already fits in ~one block).
        R = min(R, pl.cdiv(M, 2))
    grid = (pl.cdiv(M, R),)

    # Free reshape (no element reordering): (B, H*W, C) -> (B*Hh, 2, Wh, 2C)
    #   axis 1 = ki (row parity), lanes = kj*C + c.
    x_in = x.reshape(M, 2, Wh, 2 * C)

    bytes_accessed = 2 * x.size * x.dtype.itemsize            # read once + write once
    flops = 2 * 2 * (M * Wh) * (2 * C) * (4 * C)               # the two one-hot contractions

    out = pl.pallas_call(
        _patch_merge_kernel,
        out_shape=jax.ShapeDtypeStruct((M, Wh, 4 * C), x.dtype),
        grid_spec=pltpu.PrefetchScalarGridSpec(
            num_scalar_prefetch=0,
            grid=grid,
            in_specs=[pl.BlockSpec((R, 2, Wh, 2 * C), lambda g: (g, 0, 0, 0))],
            out_specs=pl.BlockSpec((R, Wh, 4 * C), lambda g: (g, 0, 0)),
        ),
        compiler_params=pltpu.CompilerParams(
            dimension_semantics=("parallel",),
            vmem_limit_bytes=vmem_limit,
        ),
        cost_estimate=pl.CostEstimate(
            flops=flops, transcendentals=0, bytes_accessed=bytes_accessed),
    )(x_in)

    # Free reshape only (row-major compatible): (B*Hh, Wh, 4C) -> (B, Hh*Wh, 4C).
    return out.reshape(B, Hh * Wh, 4 * C)


def _reference(x, img_size):
    # Pure-JAX reference of unfold(k=2, s=2).transpose(-1, -2).
    B, N, C = x.shape
    H = W = img_size
    Hh, Wh = H // 2, W // 2
    x6 = x.reshape(B, Hh, 2, Wh, 2, C)
    y = jnp.transpose(x6, (0, 1, 3, 5, 2, 4))        # (B, Hh, Wh, C, 2, 2)
    return y.reshape(B, Hh * Wh, 4 * C)


if __name__ == "__main__":
    img_size = 16
    B, C = 2, 32                                     # C=32 -> 4C = 128: lane-dense even in the demo
    key = jax.random.PRNGKey(0)
    x = jax.random.normal(key, (B, img_size * img_size, C), dtype=jnp.float32)
    # Round values to bf16-representable f32 so the exactness check below is independent of how
    # many bf16 passes the MXU uses for the f32 one-hot contraction (the kernel itself requests
    # HIGHEST precision for general f32 inputs).
    x = x.astype(jnp.bfloat16).astype(jnp.float32)

    out = jax.block_until_ready(patch_merge(x, img_size))
    ref = _reference(x, img_size)
    assert out.shape == (B, (img_size // 2) ** 2, 4 * C)
    np.testing.assert_allclose(np.asarray(out), np.asarray(ref), rtol=1e-6, atol=1e-6)
    print("KERNEL_OK")
</pallas_src>

<mosaic_0001>
module attributes {stable_mosaic.version = 11 : i64} {
  func.func @_patch_merge_kernel(%arg0: i32, %arg1: memref<8x2x8x64xf32, #tpu.memory_space<vmem>>, %arg2: memref<8x8x128xf32, #tpu.memory_space<vmem>>) attributes {dimension_semantics = [#tpu.dimension_semantics<parallel>], iteration_bounds = array<i64: 2>, scalar_prefetch = 0 : i64, scratch_operands = 0 : i64, tpu.core_type = #tpu.core_type<tc>, window_params = [{transform_indices = @transform_0, window_bounds = array<i64: 8, 2, 8, 64>}, {transform_indices = @transform_1, window_bounds = array<i64: 8, 8, 128>}]} {
    %c0 = arith.constant 0 : index
    %c0_0 = arith.constant 0 : index
    %c0_1 = arith.constant 0 : index
    %c0_2 = arith.constant 0 : index
    %0 = vector.load %arg1[%c0, %c0_0, %c0_1, %c0_2] : memref<8x2x8x64xf32, #tpu.memory_space<vmem>>, vector<8x1x8x64xf32>
    %1 = vector.shape_cast %0 : vector<8x1x8x64xf32> to vector<8x8x64xf32>
    %2 = vector.shape_cast %1 : vector<8x8x64xf32> to vector<64x64xf32>
    %c0_3 = arith.constant 0 : index
    %c1 = arith.constant 1 : index
    %c0_4 = arith.constant 0 : index
    %c0_5 = arith.constant 0 : index
    %3 = vector.load %arg1[%c0_3, %c1, %c0_4, %c0_5] : memref<8x2x8x64xf32, #tpu.memory_space<vmem>>, vector<8x1x8x64xf32>
    %4 = vector.shape_cast %3 : vector<8x1x8x64xf32> to vector<8x8x64xf32>
    %5 = vector.shape_cast %4 : vector<8x8x64xf32> to vector<64x64xf32>
    %6 = tpu.iota {dimensions = array<i32: 0>} : vector<64x128xi32>
    %7 = tpu.iota {dimensions = array<i32: 1>} : vector<64x128xi32>
    %c32_i32 = arith.constant 32 : i32
    %8 = vector.broadcast %c32_i32 : i32 to vector<64x128xi32>
    %9 = arith.cmpi sge, %6, %8 : vector<64x128xi32>
    %10 = arith.extui %9 : vector<64x128xi1> to vector<64x128xi32>
    %c32_i32_6 = arith.constant 32 : i32
    %11 = vector.broadcast %c32_i32_6 : i32 to vector<64x128xi32>
    %12 = arith.muli %10, %11 : vector<64x128xi32>
    %13 = arith.subi %6, %12 : vector<64x128xi32>
    %c4_i32 = arith.constant 4 : i32
    %14 = vector.broadcast %c4_i32 : i32 to vector<64x128xi32>
    %15 = arith.muli %14, %13 : vector<64x128xi32>
    %16 = arith.addi %15, %10 : vector<64x128xi32>
    %17 = arith.cmpi eq, %7, %16 : vector<64x128xi32>
    %18 = arith.extui %17 : vector<64x128xi1> to vector<64x128xi32>
    %19 = arith.sitofp %18 : vector<64x128xi32> to vector<64x128xf32>
    %c4_i32_7 = arith.constant 4 : i32
    %20 = vector.broadcast %c4_i32_7 : i32 to vector<64x128xi32>
    %21 = arith.muli %20, %13 : vector<64x128xi32>
    %22 = arith.addi %21, %10 : vector<64x128xi32>
    %c2_i32 = arith.constant 2 : i32
    %23 = vector.broadcast %c2_i32 : i32 to vector<64x128xi32>
    %24 = arith.addi %22, %23 : vector<64x128xi32>
    %25 = arith.cmpi eq, %7, %24 : vector<64x128xi32>
    %26 = arith.extui %25 : vector<64x128xi1> to vector<64x128xi32>
    %27 = arith.sitofp %26 : vector<64x128xi32> to vector<64x128xf32>
    %cst = arith.constant dense<0.000000e+00> : vector<64x128xf32>
    %28 = tpu.matmul %2, %19, %cst {dimension_numbers = #tpu.dot_dimension_numbers<[1], [0], [0], [1], [0, 0, 1, 1], [], []>, precision = #tpu.contract_precision<fp32>} : vector<64x64xf32>, vector<64x128xf32>, vector<64x128xf32> -> vector<64x128xf32>
    %cst_8 = arith.constant dense<0.000000e+00> : vector<64x128xf32>
    %29 = tpu.matmul %5, %27, %cst_8 {dimension_numbers = #tpu.dot_dimension_numbers<[1], [0], [0], [1], [0, 0, 1, 1], [], []>, precision = #tpu.contract_precision<fp32>} : vector<64x64xf32>, vector<64x128xf32>, vector<64x128xf32> -> vector<64x128xf32>
    %30 = arith.addf %28, %29 : vector<64x128xf32>
    %31 = vector.shape_cast %30 : vector<64x128xf32> to vector<8x8x128xf32>
    %c0_9 = arith.constant 0 : index
    %c0_10 = arith.constant 0 : index
    %c0_11 = arith.constant 0 : index
    %32 = vector.load %arg2[%c0_9, %c0_10, %c0_11] : memref<8x8x128xf32, #tpu.memory_space<vmem>>, vector<8x8x128xf32>
    tpu.vector_store %arg2[%c0_9, %c0_10, %c0_11], %31 {strides = array<i32>} : memref<8x8x128xf32, #tpu.memory_space<vmem>>, vector<8x8x128xf32>,
    return
  }
  func.func @transform_0(%arg0: i32) -> (i32, i32, i32, i32) {
    %c0_i32 = arith.constant 0 : i32
    %c0_i32_0 = arith.constant 0 : i32
    %c0_i32_1 = arith.constant 0 : i32
    %c0_i32_2 = arith.constant 0 : i32
    return %arg0, %c0_i32, %c0_i32_0, %c0_i32_1 : i32, i32, i32, i32
  }
  func.func @transform_1(%arg0: i32) -> (i32, i32, i32) {
    %c0_i32 = arith.constant 0 : i32
    %c0_i32_0 = arith.constant 0 : i32
    %c0_i32_1 = arith.constant 0 : i32
    return %arg0, %c0_i32, %c0_i32_0 : i32, i32, i32
  }
}

</mosaic_0001>

<llo_original>
// kernel: tpu_custom_call.1
$region0: #{tpu_custom_call.1}
  #allocation0 [shape = 'u32[]', space=smem, size = 0x4, offset = 0x4, fixed_abs, tag = 'smem constant byte address 0x4 - core index']
  #allocation1 [shape = 'u32[144,128]{1,0:T(1,128)}', space=vmem, size = 0x12000, scoped, tag = 'internal scratch']
  %s0 = inlined_call_operand.hbm [shape: f32[16,2,8,64], index: 0, kind: input, shape index: {}]
  %s1 = inlined_call_operand.hbm [shape: f32[16,8,128], index: 1, kind: output, shape index: {}]
  %s2 = sld [smem:[#allocation0]]
  $region41: #{tpu_custom_call.1} parent=0
    _
  %s4 = ssub.s32 1, %s2
  %s5 = scalar_select 0, %s4, %s2
  $region1: #{tpu_custom_call.1} parent=0
    #allocation2 [shape = 'u8[131072]{0}', space=vmem, size = 0x20000, scoped, tag = 'input window, operand 0']
    #allocation3 [shape = 's32[2]{0}', space=sflag, size = 0x8, scoped, tag = 'scoped memory for tpu_custom_call.1']
    #allocation4 [shape = 's32[2]{0}', space=sflag, size = 0x8, scoped, tag = 'scoped memory for tpu_custom_call.1']
    #allocation5 [shape = 'u8[65536]{0}', space=vmem, size = 0x10000, scoped, tag = 'output window, operand 0']
    %6 = vsyncpa [#allocation3], 0
    %s7 = scalar_lea.sflag [#allocation3], 1
    %8 = vsyncpa %s7, 0
    %9 = vsyncpa [#allocation4], 0
    %s10 = scalar_lea.sflag [#allocation4], 1
    %11 = vsyncpa %s10, 0
    loop: start=0, step=1, limit=4
    $region2: #{tpu_custom_call.1} parent=1 // loop_pre_header
      _
    $region3: #{tpu_custom_call.1} parent=1 // loop_header
      %s13 = sphi 0, %s17
      %p14 = scmp.ge.s32.totalorder %s13, 4
      %s23 = sphi 0, %s25
      %s26 = sphi 0, %s23
      %s27 = sphi 0, %s26
      %s43 = sphi 0, %s27
      %s49 = sphi 0, %s51
      %s52 = sphi 0, %s49
      %s53 = sphi 0, %s52
      %s69 = sphi 0, %s53
    $region4: #{tpu_custom_call.1} parent=1 // loop_header_branch
      %16 = sbr.rel (%p14) target = $region8
    $region5: #{tpu_custom_call.1} parent=1 // loop_body
      %s18 = ssub.s32 %s13, 1
      %s19 = ssub.s32 %s13, 2
      %s20 = sadd.s32 %s13, 1
      %s21 = ssub.s32 %s13, %s20
      %p22 = scmp.eq.s32.totalorder %s21, 0
      %s24 = sadd.s32 %s23, 1
      %s25 = scalar_select %p22, %s23, %s24
      %p28 = pneg %p22
      %p29 = scmp.eq.s32.totalorder %s13, 1
      %p30 = por %p28, %p29
      %p31 = scmp.ne.s32.totalorder %s23, %s26
      %p32 = scmp.eq.s32.totalorder %s13, 0
      %p33 = por %p31, %p32
      %p34 = scmp.ne.s32.totalorder %s23, %s26
      %p35 = scmp.eq.s32.totalorder %s18, 1
      %p36 = por %p34, %p35
      %p37 = scmp.ne.s32.totalorder %s26, %s27
      %p38 = scmp.eq.s32.totalorder %s18, 0
      %p39 = por %p37, %p38
      %p40 = scmp.ne.s32.totalorder %s26, %s27
      %p41 = scmp.eq.s32.totalorder %s19, 1
      %p42 = por %p40, %p41
      %p44 = scmp.ne.s32.totalorder %s27, %s43
      %p45 = scmp.eq.s32.totalorder %s19, 0
      %p46 = por %p44, %p45
      %s47 = ssub.s32 %s13, %s20
      %p48 = scmp.eq.s32.totalorder %s47, 0
      %s50 = sadd.s32 %s49, 1
      %s51 = scalar_select %p48, %s49, %s50
      %p54 = pneg %p48
      %p55 = scmp.eq.s32.totalorder %s13, 1
      %p56 = por %p54, %p55
      %p57 = scmp.ne.s32.totalorder %s49, %s52
      %p58 = scmp.eq.s32.totalorder %s13, 0
      %p59 = por %p57, %p58
      %p60 = scmp.ne.s32.totalorder %s49, %s52
      %p61 = scmp.eq.s32.totalorder %s18, 1
      %p62 = por %p60, %p61
      %p63 = scmp.ne.s32.totalorder %s52, %s53
      %p64 = scmp.eq.s32.totalorder %s18, 0
      %p65 = por %p63, %p64
      %p66 = scmp.ne.s32.totalorder %s52, %s53
      %p67 = scmp.eq.s32.totalorder %s19, 1
      %p68 = por %p66, %p67
      %p70 = scmp.ne.s32.totalorder %s53, %s69
      %p71 = scmp.eq.s32.totalorder %s19, 0
      %p72 = por %p70, %p71
      %p73 = scmp.le.s32.totalorder 1, %s13
      %p74 = scmp.lt.s32.totalorder %s13, 3
      %p75 = pnand %p73, %p74
      %p76 = pneg %p75
      // Predicated region
      $region9: #{tpu_custom_call.1} parent=5 // pred_check
        _
      $region10: #{tpu_custom_call.1} parent=5 // pred_check_branch
        %78 = sbr.rel (%p75) target = $region12
      $region11: #{tpu_custom_call.1} parent=5 // pred_region
        %s79 = ssub.s32 %s13, 1
      $region12: #{tpu_custom_call.1} parent=5 // pred_fallthru
        _
      %p80 = scmp.lt.s32.totalorder %s13, 2
      // Predicated region
      $region13: #{tpu_custom_call.1} parent=5 // pred_check
        %p81 = pneg %p80
      $region14: #{tpu_custom_call.1} parent=5 // pred_check_branch
        %83 = sbr.rel (%p81) target = $region16
      $region15: #{tpu_custom_call.1} parent=5 // pred_region
        // Predicated region
        $region17: #{tpu_custom_call.1} parent=15 // pred_check
          %p84 = pneg %p33
        $region18: #{tpu_custom_call.1} parent=15 // pred_check_branch
          %86 = sbr.rel (%p84) target = $region20
        $region19: #{tpu_custom_call.1} parent=15 // pred_region
          %s87 = sand.u32 %s23, 1
          %s88 = scalar_lea.sflag [#allocation3], %s87
          %s89 = sand.u32 %s23, 1
          %s90 = smul.addr %s89, 128
          %s91 = scalar_lea.vmem [#allocation2], %s90
          %s92 = smul.u32 8, %s13
          %s94 = ssub.s32 2048, 2048
          %95 = vsyncadd %s88, %s94
          %s96 = smul.addr %s92, 2
          %s97 = smul.addr %s96, 128
          %s98 = scalar_lea.hbm %s0, %s97
          %s99 = sshll.u32 %s91, 4
          %s100 = int_to_ptr.vmem [resolvable:$true] %s99
          %105 = dma.hbm_to_vmem [thread:$0]  %s98, 2048, %s100, %s88, 128, 128, 8
        $region20: #{tpu_custom_call.1} parent=15 // pred_fallthru
          _
      $region16: #{tpu_custom_call.1} parent=5 // pred_fallthru
        _
      %p106 = scmp.le.s32.totalorder 1, %s13
      %p107 = scmp.lt.s32.totalorder %s13, 3
      %p108 = pnand %p106, %p107
      %p109 = pneg %p108
      // Predicated region
      $region21: #{tpu_custom_call.1} parent=5 // pred_check
        _
      $region22: #{tpu_custom_call.1} parent=5 // pred_check_branch
        %111 = sbr.rel (%p108) target = $region24
      $region23: #{tpu_custom_call.1} parent=5 // pred_region
        %s112 = ssub.s32 %s13, 1
        %s113 = sand.u32 %s26, 1
        %s114 = scalar_lea.sflag [#allocation3], %s113
        %s115 = sand.u32 %s26, 1
        %s116 = smul.addr %s115, 128
        %s117 = scalar_lea.vmem [#allocation2], %s116
        // Predicated region
        $region25: #{tpu_custom_call.1} parent=23 // pred_check
          %p118 = pneg %p39
        $region26: #{tpu_custom_call.1} parent=23 // pred_check_branch
          %120 = sbr.rel (%p118) target = $region28
        $region27: #{tpu_custom_call.1} parent=23 // pred_region
          %121 = dma.done %s114, 2048
        $region28: #{tpu_custom_call.1} parent=23 // pred_fallthru
          _
        %s122 = sand.u32 %s26, 1
        %s123 = scalar_lea.sflag [#allocation3], %s122
        %s124 = sand.u32 %s26, 1
        %s125 = smul.addr %s124, 128
        %s126 = scalar_lea.vmem [#allocation2], %s125
        %p127 = pneg %p39
        %p128 = pneg %p36
        %p129 = pneg %p65
        %p130 = pneg %p62
        %s131 = sand.u32 %s52, 1
        %s132 = scalar_lea.sflag [#allocation4], %s131
        %s133 = sand.u32 %s52, 1
        %s134 = smul.addr %s133, 64
        %s135 = scalar_lea.vmem [#allocation5], %s134
        %s136 = smul.u32 8, %s18
        %s137 = smul.u32 8, %s18
        %v138 = vld [vmem:[%s117] sm:$0xff]
        %v139 = vld [vmem:[%s117 + $0x10] sm:$0xff]
        %v140 = vld [vmem:[%s117 + $0x20] sm:$0xff]
        %v141 = vld [vmem:[%s117 + $0x30] sm:$0xff]
        %v142 = vld [vmem:[%s117 + $0x40] sm:$0xff]
        %v143 = vld [vmem:[%s117 + $0x50] sm:$0xff]
        %v144 = vld [vmem:[%s117 + $0x60] sm:$0xff]
        %v145 = vld [vmem:[%s117 + $0x70] sm:$0xff]
        %s146 = scalar_lea.vmem %s117, 8 [#allocation2]
        %v147 = vld [vmem:[%s146] sm:$0xff]
        %v148 = vld [vmem:[%s146 + $0x10] sm:$0xff]
        %v149 = vld [vmem:[%s146 + $0x20] sm:$0xff]
        %v150 = vld [vmem:[%s146 + $0x30] sm:$0xff]
        %v151 = vld [vmem:[%s146 + $0x40] sm:$0xff]
        %v152 = vld [vmem:[%s146 + $0x50] sm:$0xff]
        %v153 = vld [vmem:[%s146 + $0x60] sm:$0xff]
        %v154 = vld [vmem:[%s146 + $0x70] sm:$0xff]
        %v155 = vlaneseq
        %v156 = vshrl.u32 %v155, 7
        %v157 = vadd.s32 %v156, 8
        %v158 = vadd.s32 %v156, 16
        %v159 = vadd.s32 %v156, 24
        %v160 = vadd.s32 %v156, 32
        %v161 = vadd.s32 %v156, 40
        %v162 = vadd.s32 %v156, 48
        %v163 = vadd.s32 %v156, 56
        %v164 = vlaneseq
        %v165 = vand.u32 %v164, 127
        %vm166 = vcmp.ge.s32.totalorder %v156, 32
        %vm167 = vcmp.ge.s32.totalorder %v157, 32
        %vm168 = vcmp.ge.s32.totalorder %v158, 32
        %vm169 = vcmp.ge.s32.totalorder %v159, 32
        %vm170 = vcmp.ge.s32.totalorder %v160, 32
        %vm171 = vcmp.ge.s32.totalorder %v161, 32
        %vm172 = vcmp.ge.s32.totalorder %v162, 32
        %vm173 = vcmp.ge.s32.totalorder %v163, 32
        %v174 = vsel %vm166, 1, 0
        %v175 = vsel %vm167, 1, 0
        %v176 = vsel %vm168, 1, 0
        %v177 = vsel %vm169, 1, 0
        %v178 = vsel %vm170, 1, 0
        %v179 = vsel %vm171, 1, 0
        %v180 = vsel %vm172, 1, 0
        %v181 = vsel %vm173, 1, 0
        %v182 = vmul.u32 %v174, 32
        %v183 = vmul.u32 %v175, 32
        %v184 = vmul.u32 %v176, 32
        %v185 = vmul.u32 %v177, 32
        %v186 = vmul.u32 %v178, 32
        %v187 = vmul.u32 %v179, 32
        %v188 = vmul.u32 %v180, 32
        %v189 = vmul.u32 %v181, 32
        %v190 = vsub.s32 %v156, %v182
        %v191 = vsub.s32 %v157, %v183
        %v192 = vsub.s32 %v158, %v184
        %v193 = vsub.s32 %v159, %v185
        %v194 = vsub.s32 %v160, %v186
        %v195 = vsub.s32 %v161, %v187
        %v196 = vsub.s32 %v162, %v188
        %v197 = vsub.s32 %v163, %v189
        %v198 = vmul.u32 %v190, 4
        %v199 = vmul.u32 %v191, 4
        %v200 = vmul.u32 %v192, 4
        %v201 = vmul.u32 %v193, 4
        %v202 = vmul.u32 %v194, 4
        %v203 = vmul.u32 %v195, 4
        %v204 = vmul.u32 %v196, 4
        %v205 = vmul.u32 %v197, 4
        %v206 = vadd.s32 %v198, %v174
        %v207 = vadd.s32 %v199, %v175
        %v208 = vadd.s32 %v200, %v176
        %v209 = vadd.s32 %v201, %v177
        %v210 = vadd.s32 %v202, %v178
        %v211 = vadd.s32 %v203, %v179
        %v212 = vadd.s32 %v204, %v180
        %v213 = vadd.s32 %v205, %v181
        %vm214 = vcmp.eq.s32.totalorder %v165, %v206
        %vm215 = vcmp.eq.s32.totalorder %v165, %v207
        %vm216 = vcmp.eq.s32.totalorder %v165, %v208
        %vm217 = vcmp.eq.s32.totalorder %v165, %v209
        %vm218 = vcmp.eq.s32.totalorder %v165, %v210
        %vm219 = vcmp.eq.s32.totalorder %v165, %v211
        %vm220 = vcmp.eq.s32.totalorder %v165, %v212
        %vm221 = vcmp.eq.s32.totalorder %v165, %v213
        %v222 = vsel %vm214, 1, 0
        %v223 = vsel %vm215, 1, 0
        %v224 = vsel %vm216, 1, 0
        %v225 = vsel %vm217, 1, 0
        %v226 = vsel %vm218, 1, 0
        %v227 = vsel %vm219, 1, 0
        %v228 = vsel %vm220, 1, 0
        %v229 = vsel %vm221, 1, 0
        %v230 = vcvt.s32.f32 %v222
        %v231 = vcvt.s32.f32 %v223
        %v232 = vcvt.s32.f32 %v224
        %v233 = vcvt.s32.f32 %v225
        %v234 = vcvt.s32.f32 %v226
        %v235 = vcvt.s32.f32 %v227
        %v236 = vcvt.s32.f32 %v228
        %v237 = vcvt.s32.f32 %v229
        %v238 = vadd.s32 %v206, 2
        %v239 = vadd.s32 %v207, 2
        %v240 = vadd.s32 %v208, 2
        %v241 = vadd.s32 %v209, 2
        %v242 = vadd.s32 %v210, 2
        %v243 = vadd.s32 %v211, 2
        %v244 = vadd.s32 %v212, 2
        %v245 = vadd.s32 %v213, 2
        %vm246 = vcmp.eq.s32.totalorder %v165, %v238
        %vm247 = vcmp.eq.s32.totalorder %v165, %v239
        %vm248 = vcmp.eq.s32.totalorder %v165, %v240
        %vm249 = vcmp.eq.s32.totalorder %v165, %v241
        %vm250 = vcmp.eq.s32.totalorder %v165, %v242
        %vm251 = vcmp.eq.s32.totalorder %v165, %v243
        %vm252 = vcmp.eq.s32.totalorder %v165, %v244
        %vm253 = vcmp.eq.s32.totalorder %v165, %v245
        %v254 = vsel %vm246, 1, 0
        %v255 = vsel %vm247, 1, 0
        %v256 = vsel %vm248, 1, 0
        %v257 = vsel %vm249, 1, 0
        %v258 = vsel %vm250, 1, 0
        %v259 = vsel %vm251, 1, 0
        %v260 = vsel %vm252, 1, 0
        %v261 = vsel %vm253, 1, 0
        %v262 = vcvt.s32.f32 %v254
        %v263 = vcvt.s32.f32 %v255
        %v264 = vcvt.s32.f32 %v256
        %v265 = vcvt.s32.f32 %v257
        %v266 = vcvt.s32.f32 %v258
        %v267 = vcvt.s32.f32 %v259
        %v268 = vcvt.s32.f32 %v260
        %v269 = vcvt.s32.f32 %v261
        %vm270 = vcmask 523264
        %v272 = vsel %vm270, %v147, 0
        %v275 = vsel %vm270, %v148, 0
        %v278 = vsel %vm270, %v149, 0
        %v281 = vsel %vm270, %v150, 0
        %v284 = vsel %vm270, %v151, 0
        %v287 = vsel %vm270, %v152, 0
        %v290 = vsel %vm270, %v153, 0
        %v293 = vsel %vm270, %v154, 0
        %295 = vmatprep.subr.mxu0 0.0
        %296 = vmatpush1.msra.mxu0 0.0
        %297 = vmatprep.subr.mxu0 0.0
        %298 = vmatpush1.msra.mxu0 0.0
        %299 = vmatprep.subr.mxu0 0.0
        %300 = vmatpush1.msra.mxu0 0.0
        %301 = vmatprep.subr.mxu0 0.0
        %302 = vmatpush1.msra.mxu0 0.0
        %303 = vmatprep.subr.mxu0 0.0
        %304 = vmatpush1.msra.mxu0 0.0
        %305 = vmatprep.subr.mxu0 0.0
        %306 = vmatpush1.msra.mxu0 0.0
        %307 = vmatprep.subr.mxu0 0.0
        %308 = vmatpush1.msra.mxu0 0.0
        %309 = vmatprep.subr.mxu0 0.0
        %310 = vmatpush1.msra.mxu0 0.0
        %311 = vmatprep.subr.mxu0 0.0
        %v312 = vand.u32 %v269, 4294901760
        %313 = vmatpush1.msra.mxu0 %v312
        %314 = vmatprep.subr.mxu0 0.0
        %v315 = vand.u32 %v268, 4294901760
        %316 = vmatpush1.msra.mxu0 %v315
        %317 = vmatprep.subr.mxu0 0.0
        %v318 = vand.u32 %v267, 4294901760
        %319 = vmatpush1.msra.mxu0 %v318
        %320 = vmatprep.subr.mxu0 0.0
        %v321 = vand.u32 %v266, 4294901760
        %322 = vmatpush1.msra.mxu0 %v321
        %323 = vmatprep.subr.mxu0 0.0
        %v324 = vand.u32 %v265, 4294901760
        %325 = vmatpush1.msra.mxu0 %v324
        %326 = vmatprep.subr.mxu0 0.0
        %v327 = vand.u32 %v264, 4294901760
        %328 = vmatpush1.msra.mxu0 %v327
        %329 = vmatprep.subr.mxu0 0.0
        %v330 = vand.u32 %v263, 4294901760
        %331 = vmatpush1.msra.mxu0 %v330
        %332 = vmatprep.subr.mxu0 0.0
        %v333 = vand.u32 %v262, 4294901760
        %334 = vmatpush1.msra.mxu0 %v333
        %335 = vmatprep.subr.mxu0 0.0
        %336 = vmatpush2.msra.mxu0 0.0
        %337 = vmatprep.subr.mxu0 0.0
        %338 = vmatpush2.msra.mxu0 0.0
        %339 = vmatprep.subr.mxu0 0.0
        %340 = vmatpush2.msra.mxu0 0.0
        %341 = vmatprep.subr.mxu0 0.0
        %342 = vmatpush2.msra.mxu0 0.0
        %343 = vmatprep.subr.mxu0 0.0
        %344 = vmatpush2.msra.mxu0 0.0
        %345 = vmatprep.subr.mxu0 0.0
        %346 = vmatpush2.msra.mxu0 0.0
        %347 = vmatprep.subr.mxu0 0.0
        %348 = vmatpush2.msra.mxu0 0.0
        %349 = vmatprep.subr.mxu0 0.0
        %350 = vmatpush2.msra.mxu0 0.0
        %351 = vmatprep.subr.mxu0 0.0
        %352 = vmatpush2.msra.mxu0 0.0
        %353 = vmatprep.subr.mxu0 0.0
        %354 = vmatpush2.msra.mxu0 0.0
        %355 = vmatprep.subr.mxu0 0.0
        %356 = vmatpush2.msra.mxu0 0.0
        %357 = vmatprep.subr.mxu0 0.0
        %358 = vmatpush2.msra.mxu0 0.0
        %359 = vmatprep.subr.mxu0 0.0
        %360 = vmatpush2.msra.mxu0 0.0
        %361 = vmatprep.subr.mxu0 0.0
        %362 = vmatpush2.msra.mxu0 0.0
        %363 = vmatprep.subr.mxu0 0.0
        %364 = vmatpush2.msra.mxu0 0.0
        %365 = vmatprep.subr.mxu0 0.0
        %366 = vmatpush2.msra.mxu0 0.0
        %367 = vmatprep.mubr.f32.mxu0 0.0
        %v368 = vand.u32 %v272, 4294901760
        %v369 = vsub.f32 %v272, %v368
        %v370 = vand.u32 %v369, 4294901760
        %v371 = vsub.f32 %v369, %v370
        %v372 = vand.u32 %v371, 4294901760
        %373 = vmatmul.mubr.f32.gmra.mxu0 %v372
        %v374 = vpop.f32.mrf.mxu0
        %v375 = vadd.f32 0.0, %v374
        %v376 = vpop.f32.mrf.mxu0
        %377 = vmatprep.mubr.f32.mxu0 0.0
        %v378 = vand.u32 %v275, 4294901760
        %v379 = vsub.f32 %v275, %v378
        %v380 = vand.u32 %v379, 4294901760
        %v381 = vsub.f32 %v379, %v380
        %v382 = vand.u32 %v381, 4294901760
        %383 = vmatmul.mubr.f32.gmra.mxu0 %v382
        %v384 = vpop.f32.mrf.mxu0
        %v385 = vadd.f32 0.0, %v384
        %v386 = vpop.f32.mrf.mxu0
        %387 = vmatprep.mubr.f32.mxu0 0.0
        %v388 = vand.u32 %v278, 4294901760
        %v389 = vsub.f32 %v278, %v388
        %v390 = vand.u32 %v389, 4294901760
        %v391 = vsub.f32 %v389, %v390
        %v392 = vand.u32 %v391, 4294901760
        %393 = vmatmul.mubr.f32.gmra.mxu0 %v392
        %v394 = vpop.f32.mrf.mxu0
        %v395 = vadd.f32 0.0, %v394
        %v396 = vpop.f32.mrf.mxu0
        %397 = vmatprep.mubr.f32.mxu0 0.0
        %v398 = vand.u32 %v281, 4294901760
        %v399 = vsub.f32 %v281, %v398
        %v400 = vand.u32 %v399, 4294901760
        %v401 = vsub.f32 %v399, %v400
        %v402 = vand.u32 %v401, 4294901760
        %403 = vmatmul.mubr.f32.gmra.mxu0 %v402
        %v404 = vpop.f32.mrf.mxu0
        %v405 = vadd.f32 0.0, %v404
        %v406 = vpop.f32.mrf.mxu0
        %407 = vmatprep.mubr.f32.mxu0 0.0
        %v408 = vand.u32 %v284, 4294901760
        %v409 = vsub.f32 %v284, %v408
        %v410 = vand.u32 %v409, 4294901760
        %v411 = vsub.f32 %v409, %v410
        %v412 = vand.u32 %v411, 4294901760
        %413 = vmatmul.mubr.f32.gmra.mxu0 %v412
        %v414 = vpop.f32.mrf.mxu0
        %v415 = vadd.f32 0.0, %v414
        %v416 = vpop.f32.mrf.mxu0
        %417 = vmatprep.mubr.f32.mxu0 0.0
        %v418 = vand.u32 %v287, 4294901760
        %v419 = vsub.f32 %v287, %v418
        %v420 = vand.u32 %v419, 4294901760
        %v421 = vsub.f32 %v419, %v420
        %v422 = vand.u32 %v421, 4294901760
        %423 = vmatmul.mubr.f32.gmra.mxu0 %v422
        %v424 = vpop.f32.mrf.mxu0
        %v425 = vadd.f32 0.0, %v424
        %v426 = vpop.f32.mrf.mxu0
        %427 = vmatprep.mubr.f32.mxu0 0.0
        %v428 = vand.u32 %v290, 4294901760
        %v429 = vsub.f32 %v290, %v428
        %v430 = vand.u32 %v429, 4294901760
        %v431 = vsub.f32 %v429, %v430
        %v432 = vand.u32 %v431, 4294901760
        %433 = vmatmul.mubr.f32.gmra.mxu0 %v432
        %v434 = vpop.f32.mrf.mxu0
        %v435 = vadd.f32 0.0, %v434
        %v436 = vpop.f32.mrf.mxu0
        %437 = vmatprep.mubr.f32.mxu0 0.0
        %v438 = vand.u32 %v293, 4294901760
        %v439 = vsub.f32 %v293, %v438
        %v440 = vand.u32 %v439, 4294901760
        %v441 = vsub.f32 %v439, %v440
        %v442 = vand.u32 %v441, 4294901760
        %443 = vmatmul.mubr.f32.gmra.mxu0 %v442
        %v444 = vpop.f32.mrf.mxu0
        %v445 = vadd.f32 0.0, %v444
        %v446 = vpop.f32.mrf.mxu0
        %447 = vdwg.mxu0
        %448 = vmatprep.subr.mxu0 0.0
        %449 = vmatpush1.msra.mxu0 0.0
        %450 = vmatprep.subr.mxu0 0.0
        %451 = vmatpush1.msra.mxu0 0.0
        %452 = vmatprep.subr.mxu0 0.0
        %453 = vmatpush1.msra.mxu0 0.0
        %454 = vmatprep.subr.mxu0 0.0
        %455 = vmatpush1.msra.mxu0 0.0
        %456 = vmatprep.subr.mxu0 0.0
        %457 = vmatpush1.msra.mxu0 0.0
        %458 = vmatprep.subr.mxu0 0.0
        %459 = vmatpush1.msra.mxu0 0.0
        %460 = vmatprep.subr.mxu0 0.0
        %461 = vmatpush1.msra.mxu0 0.0
        %462 = vmatprep.subr.mxu0 0.0
        %463 = vmatpush1.msra.mxu0 0.0
        %464 = vmatprep.subr.mxu0 0.0
        %v465 = vand.u32 %v269, 4294901760
        %v466 = vsub.f32 %v269, %v465
        %v467 = vand.u32 %v466, 4294901760
        %v468 = vsub.f32 %v466, %v467
        %v469 = vand.u32 %v468, 4294901760
        %470 = vmatpush1.msra.mxu0 %v469
        %471 = vmatprep.subr.mxu0 0.0
        %v472 = vand.u32 %v268, 4294901760
        %v473 = vsub.f32 %v268, %v472
        %v474 = vand.u32 %v473, 4294901760
        %v475 = vsub.f32 %v473, %v474
        %v476 = vand.u32 %v475, 4294901760
        %477 = vmatpush1.msra.mxu0 %v476
        %478 = vmatprep.subr.mxu0 0.0
        %v479 = vand.u32 %v267, 4294901760
        %v480 = vsub.f32 %v267, %v479
        %v481 = vand.u32 %v480, 4294901760
        %v482 = vsub.f32 %v480, %v481
        %v483 = vand.u32 %v482, 4294901760
        %484 = vmatpush1.msra.mxu0 %v483
        %485 = vmatprep.subr.mxu0 0.0
        %v486 = vand.u32 %v266, 4294901760
        %v487 = vsub.f32 %v266, %v486
        %v488 = vand.u32 %v487, 4294901760
        %v489 = vsub.f32 %v487, %v488
        %v490 = vand.u32 %v489, 4294901760
        %491 = vmatpush1.msra.mxu0 %v490
        %492 = vmatprep.subr.mxu0 0.0
        %v493 = vand.u32 %v265, 4294901760
        %v494 = vsub.f32 %v265, %v493
        %v495 = vand.u32 %v494, 4294901760
        %v496 = vsub.f32 %v494, %v495
        %v497 = vand.u32 %v496, 4294901760
        %498 = vmatpush1.msra.mxu0 %v497
        %499 = vmatprep.subr.mxu0 0.0
        %v500 = vand.u32 %v264, 4294901760
        %v501 = vsub.f32 %v264, %v500
        %v502 = vand.u32 %v501, 4294901760
        %v503 = vsub.f32 %v501, %v502
        %v504 = vand.u32 %v503, 4294901760
        %505 = vmatpush1.msra.mxu0 %v504
        %506 = vmatprep.subr.mxu0 0.0
        %v507 = vand.u32 %v263, 4294901760
        %v508 = vsub.f32 %v263, %v507
        %v509 = vand.u32 %v508, 4294901760
        %v510 = vsub.f32 %v508, %v509
        %v511 = vand.u32 %v510, 4294901760
        %512 = vmatpush1.msra.mxu0 %v511
        %513 = vmatprep.subr.mxu0 0.0
        %v514 = vand.u32 %v262, 4294901760
        %v515 = vsub.f32 %v262, %v514
        %v516 = vand.u32 %v515, 4294901760
        %v517 = vsub.f32 %v515, %v516
        %v518 = vand.u32 %v517, 4294901760
        %519 = vmatpush1.msra.mxu0 %v518
        %520 = vmatprep.subr.mxu0 0.0
        %521 = vmatpush2.msra.mxu0 0.0
        %522 = vmatprep.subr.mxu0 0.0
        %523 = vmatpush2.msra.mxu0 0.0
        %524 = vmatprep.subr.mxu0 0.0
        %525 = vmatpush2.msra.mxu0 0.0
        %526 = vmatprep.subr.mxu0 0.0
        %527 = vmatpush2.msra.mxu0 0.0
        %528 = vmatprep.subr.mxu0 0.0
        %529 = vmatpush2.msra.mxu0 0.0
        %530 = vmatprep.subr.mxu0 0.0
        %531 = vmatpush2.msra.mxu0 0.0
        %532 = vmatprep.subr.mxu0 0.0
        %533 = vmatpush2.msra.mxu0 0.0
        %534 = vmatprep.subr.mxu0 0.0
        %535 = vmatpush2.msra.mxu0 0.0
        %536 = vmatprep.subr.mxu0 0.0
        %537 = vmatpush2.msra.mxu0 0.0
        %538 = vmatprep.subr.mxu0 0.0
        %539 = vmatpush2.msra.mxu0 0.0
        %540 = vmatprep.subr.mxu0 0.0
        %541 = vmatpush2.msra.mxu0 0.0
        %542 = vmatprep.subr.mxu0 0.0
        %543 = vmatpush2.msra.mxu0 0.0
        %544 = vmatprep.subr.mxu0 0.0
        %545 = vmatpush2.msra.mxu0 0.0
        %546 = vmatprep.subr.mxu0 0.0
        %547 = vmatpush2.msra.mxu0 0.0
        %548 = vmatprep.subr.mxu0 0.0
        %549 = vmatpush2.msra.mxu0 0.0
        %550 = vmatprep.subr.mxu0 0.0
        %551 = vmatpush2.msra.mxu0 0.0
        %552 = vmatprep.mubr.f32.mxu0 0.0
        %v553 = vand.u32 %v272, 4294901760
        %554 = vmatmul.mubr.f32.gmra.mxu0 %v553
        %v555 = vpop.f32.mrf.mxu0
        %v556 = vadd.f32 %v375, %v555
        %v557 = vpop.f32.mrf.mxu0
        %558 = vmatprep.mubr.f32.mxu0 0.0
        %v559 = vand.u32 %v275, 4294901760
        %560 = vmatmul.mubr.f32.gmra.mxu0 %v559
        %v561 = vpop.f32.mrf.mxu0
        %v562 = vadd.f32 %v385, %v561
        %v563 = vpop.f32.mrf.mxu0
        %564 = vmatprep.mubr.f32.mxu0 0.0
        %v565 = vand.u32 %v278, 4294901760
        %566 = vmatmul.mubr.f32.gmra.mxu0 %v565
        %v567 = vpop.f32.mrf.mxu0
        %v568 = vadd.f32 %v395, %v567
        %v569 = vpop.f32.mrf.mxu0
        %570 = vmatprep.mubr.f32.mxu0 0.0
        %v571 = vand.u32 %v281, 4294901760
        %572 = vmatmul.mubr.f32.gmra.mxu0 %v571
        %v573 = vpop.f32.mrf.mxu0
        %v574 = vadd.f32 %v405, %v573
        %v575 = vpop.f32.mrf.mxu0
        %576 = vmatprep.mubr.f32.mxu0 0.0
        %v577 = vand.u32 %v284, 4294901760
        %578 = vmatmul.mubr.f32.gmra.mxu0 %v577
        %v579 = vpop.f32.mrf.mxu0
        %v580 = vadd.f32 %v415, %v579
        %v581 = vpop.f32.mrf.mxu0
        %582 = vmatprep.mubr.f32.mxu0 0.0
        %v583 = vand.u32 %v287, 4294901760
        %584 = vmatmul.mubr.f32.gmra.mxu0 %v583
        %v585 = vpop.f32.mrf.mxu0
        %v586 = vadd.f32 %v425, %v585
        %v587 = vpop.f32.mrf.mxu0
        %588 = vmatprep.mubr.f32.mxu0 0.0
        %v589 = vand.u32 %v290, 4294901760
        %590 = vmatmul.mubr.f32.gmra.mxu0 %v589
        %v591 = vpop.f32.mrf.mxu0
        %v592 = vadd.f32 %v435, %v591
        %v593 = vpop.f32.mrf.mxu0
        %594 = vmatprep.mubr.f32.mxu0 0.0
        %v595 = vand.u32 %v293, 4294901760
        %596 = vmatmul.mubr.f32.gmra.mxu0 %v595
        %v597 = vpop.f32.mrf.mxu0
        %v598 = vadd.f32 %v445, %v597
        %v599 = vpop.f32.mrf.mxu0
        %600 = vdwg.mxu0
        %601 = vmatprep.subr.mxu0 0.0
        %602 = vmatpush1.msra.mxu0 0.0
        %603 = vmatprep.subr.mxu0 0.0
        %604 = vmatpush1.msra.mxu0 0.0
        %605 = vmatprep.subr.mxu0 0.0
        %606 = vmatpush1.msra.mxu0 0.0
        %607 = vmatprep.subr.mxu0 0.0
        %608 = vmatpush1.msra.mxu0 0.0
        %609 = vmatprep.subr.mxu0 0.0
        %610 = vmatpush1.msra.mxu0 0.0
        %611 = vmatprep.subr.mxu0 0.0
        %612 = vmatpush1.msra.mxu0 0.0
        %613 = vmatprep.subr.mxu0 0.0
        %614 = vmatpush1.msra.mxu0 0.0
        %615 = vmatprep.subr.mxu0 0.0
        %616 = vmatpush1.msra.mxu0 0.0
        %617 = vmatprep.subr.mxu0 0.0
        %v618 = vand.u32 %v269, 4294901760
        %v619 = vsub.f32 %v269, %v618
        %620 = vmatpush1.msra.mxu0 %v619
        %621 = vmatprep.subr.mxu0 0.0
        %v622 = vand.u32 %v268, 4294901760
        %v623 = vsub.f32 %v268, %v622
        %624 = vmatpush1.msra.mxu0 %v623
        %625 = vmatprep.subr.mxu0 0.0
        %v626 = vand.u32 %v267, 4294901760
        %v627 = vsub.f32 %v267, %v626
        %628 = vmatpush1.msra.mxu0 %v627
        %629 = vmatprep.subr.mxu0 0.0
        %v630 = vand.u32 %v266, 4294901760
        %v631 = vsub.f32 %v266, %v630
        %632 = vmatpush1.msra.mxu0 %v631
        %633 = vmatprep.subr.mxu0 0.0
        %v634 = vand.u32 %v265, 4294901760
        %v635 = vsub.f32 %v265, %v634
        %636 = vmatpush1.msra.mxu0 %v635
        %637 = vmatprep.subr.mxu0 0.0
        %v638 = vand.u32 %v264, 4294901760
        %v639 = vsub.f32 %v264, %v638
        %640 = vmatpush1.msra.mxu0 %v639
        %641 = vmatprep.subr.mxu0 0.0
        %v642 = vand.u32 %v263, 4294901760
        %v643 = vsub.f32 %v263, %v642
        %644 = vmatpush1.msra.mxu0 %v643
        %645 = vmatprep.subr.mxu0 0.0
        %v646 = vand.u32 %v262, 4294901760
        %v647 = vsub.f32 %v262, %v646
        %648 = vmatpush1.msra.mxu0 %v647
        %649 = vmatprep.subr.mxu0 0.0
        %650 = vmatpush2.msra.mxu0 0.0
        %651 = vmatprep.subr.mxu0 0.0
        %652 = vmatpush2.msra.mxu0 0.0
        %653 = vmatprep.subr.mxu0 0.0
        %654 = vmatpush2.msra.mxu0 0.0
        %655 = vmatprep.subr.mxu0 0.0
        %656 = vmatpush2.msra.mxu0 0.0
        %657 = vmatprep.subr.mxu0 0.0
        %658 = vmatpush2.msra.mxu0 0.0
        %659 = vmatprep.subr.mxu0 0.0
        %660 = vmatpush2.msra.mxu0 0.0
        %661 = vmatprep.subr.mxu0 0.0
        %662 = vmatpush2.msra.mxu0 0.0
        %663 = vmatprep.subr.mxu0 0.0
        %664 = vmatpush2.msra.mxu0 0.0
        %665 = vmatprep.subr.mxu0 0.0
        %666 = vmatpush2.msra.mxu0 0.0
        %667 = vmatprep.subr.mxu0 0.0
        %668 = vmatpush2.msra.mxu0 0.0
        %669 = vmatprep.subr.mxu0 0.0
        %670 = vmatpush2.msra.mxu0 0.0
        %671 = vmatprep.subr.mxu0 0.0
        %672 = vmatpush2.msra.mxu0 0.0
        %673 = vmatprep.subr.mxu0 0.0
        %674 = vmatpush2.msra.mxu0 0.0
        %675 = vmatprep.subr.mxu0 0.0
        %676 = vmatpush2.msra.mxu0 0.0
        %677 = vmatprep.subr.mxu0 0.0
        %678 = vmatpush2.msra.mxu0 0.0
        %679 = vmatprep.subr.mxu0 0.0
        %680 = vmatpush2.msra.mxu0 0.0
        %681 = vmatprep.mubr.f32.mxu0 0.0
        %v682 = vand.u32 %v272, 4294901760
        %v683 = vsub.f32 %v272, %v682
        %684 = vmatmul.mubr.f32.gmra.mxu0 %v683
        %v685 = vpop.f32.mrf.mxu0
        %v686 = vadd.f32 %v556, %v685
        %v687 = vpop.f32.mrf.mxu0
        %688 = vmatprep.mubr.f32.mxu0 0.0
        %v689 = vand.u32 %v275, 4294901760
        %v690 = vsub.f32 %v275, %v689
        %691 = vmatmul.mubr.f32.gmra.mxu0 %v690
        %v692 = vpop.f32.mrf.mxu0
        %v693 = vadd.f32 %v562, %v692
        %v694 = vpop.f32.mrf.mxu0
        %695 = vmatprep.mubr.f32.mxu0 0.0
        %v696 = vand.u32 %v278, 4294901760
        %v697 = vsub.f32 %v278, %v696
        %698 = vmatmul.mubr.f32.gmra.mxu0 %v697
        %v699 = vpop.f32.mrf.mxu0
        %v700 = vadd.f32 %v568, %v699
        %v701 = vpop.f32.mrf.mxu0
        %702 = vmatprep.mubr.f32.mxu0 0.0
        %v703 = vand.u32 %v281, 4294901760
        %v704 = vsub.f32 %v281, %v703
        %705 = vmatmul.mubr.f32.gmra.mxu0 %v704
        %v706 = vpop.f32.mrf.mxu0
        %v707 = vadd.f32 %v574, %v706
        %v708 = vpop.f32.mrf.mxu0
        %709 = vmatprep.mubr.f32.mxu0 0.0
        %v710 = vand.u32 %v284, 4294901760
        %v711 = vsub.f32 %v284, %v710
        %712 = vmatmul.mubr.f32.gmra.mxu0 %v711
        %v713 = vpop.f32.mrf.mxu0
        %v714 = vadd.f32 %v580, %v713
        %v715 = vpop.f32.mrf.mxu0
        %716 = vmatprep.mubr.f32.mxu0 0.0
        %v717 = vand.u32 %v287, 4294901760
        %v718 = vsub.f32 %v287, %v717
        %719 = vmatmul.mubr.f32.gmra.mxu0 %v718
        %v720 = vpop.f32.mrf.mxu0
        %v721 = vadd.f32 %v586, %v720
        %v722 = vpop.f32.mrf.mxu0
        %723 = vmatprep.mubr.f32.mxu0 0.0
        %v724 = vand.u32 %v290, 4294901760
        %v725 = vsub.f32 %v290, %v724
        %726 = vmatmul.mubr.f32.gmra.mxu0 %v725
        %v727 = vpop.f32.mrf.mxu0
        %v728 = vadd.f32 %v592, %v727
        %v729 = vpop.f32.mrf.mxu0
        %730 = vmatprep.mubr.f32.mxu0 0.0
        %v731 = vand.u32 %v293, 4294901760
        %v732 = vsub.f32 %v293, %v731
        %733 = vmatmul.mubr.f32.gmra.mxu0 %v732
        %v734 = vpop.f32.mrf.mxu0
        %v735 = vadd.f32 %v598, %v734
        %v736 = vpop.f32.mrf.mxu0
        %737 = vdwg.mxu0
        %738 = vmatprep.subr.mxu0 0.0
        %739 = vmatpush1.msra.mxu0 0.0
        %740 = vmatprep.subr.mxu0 0.0
        %741 = vmatpush1.msra.mxu0 0.0
        %742 = vmatprep.subr.mxu0 0.0
        %743 = vmatpush1.msra.mxu0 0.0
        %744 = vmatprep.subr.mxu0 0.0
        %745 = vmatpush1.msra.mxu0 0.0
        %746 = vmatprep.subr.mxu0 0.0
        %747 = vmatpush1.msra.mxu0 0.0
        %748 = vmatprep.subr.mxu0 0.0
        %749 = vmatpush1.msra.mxu0 0.0
        %750 = vmatprep.subr.mxu0 0.0
        %751 = vmatpush1.msra.mxu0 0.0
        %752 = vmatprep.subr.mxu0 0.0
        %753 = vmatpush1.msra.mxu0 0.0
        %754 = vmatprep.subr.mxu0 0.0
        %v755 = vand.u32 %v269, 4294901760
        %756 = vmatpush1.msra.mxu0 %v755
        %757 = vmatprep.subr.mxu0 0.0
        %v758 = vand.u32 %v268, 4294901760
        %759 = vmatpush1.msra.mxu0 %v758
        %760 = vmatprep.subr.mxu0 0.0
        %v761 = vand.u32 %v267, 4294901760
        %762 = vmatpush1.msra.mxu0 %v761
        %763 = vmatprep.subr.mxu0 0.0
        %v764 = vand.u32 %v266, 4294901760
        %765 = vmatpush1.msra.mxu0 %v764
        %766 = vmatprep.subr.mxu0 0.0
        %v767 = vand.u32 %v265, 4294901760
        %768 = vmatpush1.msra.mxu0 %v767
        %769 = vmatprep.subr.mxu0 0.0
        %v770 = vand.u32 %v264, 4294901760
        %771 = vmatpush1.msra.mxu0 %v770
        %772 = vmatprep.subr.mxu0 0.0
        %v773 = vand.u32 %v263, 4294901760
        %774 = vmatpush1.msra.mxu0 %v773
        %775 = vmatprep.subr.mxu0 0.0
        %v776 = vand.u32 %v262, 4294901760
        %777 = vmatpush1.msra.mxu0 %v776
        %778 = vmatprep.subr.mxu0 0.0
        %779 = vmatpush2.msra.mxu0 0.0
        %780 = vmatprep.subr.mxu0 0.0
        %781 = vmatpush2.msra.mxu0 0.0
        %782 = vmatprep.subr.mxu0 0.0
        %783 = vmatpush2.msra.mxu0 0.0
        %784 = vmatprep.subr.mxu0 0.0
        %785 = vmatpush2.msra.mxu0 0.0
        %786 = vmatprep.subr.mxu0 0.0
        %787 = vmatpush2.msra.mxu0 0.0
        %788 = vmatprep.subr.mxu0 0.0
        %789 = vmatpush2.msra.mxu0 0.0
        %790 = vmatprep.subr.mxu0 0.0
        %791 = vmatpush2.msra.mxu0 0.0
        %792 = vmatprep.subr.mxu0 0.0
        %793 = vmatpush2.msra.mxu0 0.0
        %794 = vmatprep.subr.mxu0 0.0
        %795 = vmatpush2.msra.mxu0 0.0
        %796 = vmatprep.subr.mxu0 0.0
        %797 = vmatpush2.msra.mxu0 0.0
        %798 = vmatprep.subr.mxu0 0.0
        %799 = vmatpush2.msra.mxu0 0.0
        %800 = vmatprep.subr.mxu0 0.0
        %801 = vmatpush2.msra.mxu0 0.0
        %802 = vmatprep.subr.mxu0 0.0
        %803 = vmatpush2.msra.mxu0 0.0
        %804 = vmatprep.subr.mxu0 0.0
        %805 = vmatpush2.msra.mxu0 0.0
        %806 = vmatprep.subr.mxu0 0.0
        %807 = vmatpush2.msra.mxu0 0.0
        %808 = vmatprep.subr.mxu0 0.0
        %809 = vmatpush2.msra.mxu0 0.0
        %810 = vmatprep.mubr.f32.mxu0 0.0
        %v811 = vand.u32 %v272, 4294901760
        %v812 = vsub.f32 %v272, %v811
        %v813 = vand.u32 %v812, 4294901760
        %814 = vmatmul.mubr.f32.gmra.mxu0 %v813
        %v815 = vpop.f32.mrf.mxu0
        %v816 = vadd.f32 %v686, %v815
        %v817 = vpop.f32.mrf.mxu0
        %818 = vmatprep.mubr.f32.mxu0 0.0
        %v819 = vand.u32 %v275, 4294901760
        %v820 = vsub.f32 %v275, %v819
        %v821 = vand.u32 %v820, 4294901760
        %822 = vmatmul.mubr.f32.gmra.mxu0 %v821
        %v823 = vpop.f32.mrf.mxu0
        %v824 = vadd.f32 %v693, %v823
        %v825 = vpop.f32.mrf.mxu0
        %826 = vmatprep.mubr.f32.mxu0 0.0
        %v827 = vand.u32 %v278, 4294901760
        %v828 = vsub.f32 %v278, %v827
        %v829 = vand.u32 %v828, 4294901760
        %830 = vmatmul.mubr.f32.gmra.mxu0 %v829
        %v831 = vpop.f32.mrf.mxu0
        %v832 = vadd.f32 %v700, %v831
        %v833 = vpop.f32.mrf.mxu0
        %834 = vmatprep.mubr.f32.mxu0 0.0
        %v835 = vand.u32 %v281, 4294901760
        %v836 = vsub.f32 %v281, %v835
        %v837 = vand.u32 %v836, 4294901760
        %838 = vmatmul.mubr.f32.gmra.mxu0 %v837
        %v839 = vpop.f32.mrf.mxu0
        %v840 = vadd.f32 %v707, %v839
        %v841 = vpop.f32.mrf.mxu0
        %842 = vmatprep.mubr.f32.mxu0 0.0
        %v843 = vand.u32 %v284, 4294901760
        %v844 = vsub.f32 %v284, %v843
        %v845 = vand.u32 %v844, 4294901760
        %846 = vmatmul.mubr.f32.gmra.mxu0 %v845
        %v847 = vpop.f32.mrf.mxu0
        %v848 = vadd.f32 %v714, %v847
        %v849 = vpop.f32.mrf.mxu0
        %850 = vmatprep.mubr.f32.mxu0 0.0
        %v851 = vand.u32 %v287, 4294901760
        %v852 = vsub.f32 %v287, %v851
        %v853 = vand.u32 %v852, 4294901760
        %854 = vmatmul.mubr.f32.gmra.mxu0 %v853
        %v855 = vpop.f32.mrf.mxu0
        %v856 = vadd.f32 %v721, %v855
        %v857 = vpop.f32.mrf.mxu0
        %858 = vmatprep.mubr.f32.mxu0 0.0
        %v859 = vand.u32 %v290, 4294901760
        %v860 = vsub.f32 %v290, %v859
        %v861 = vand.u32 %v860, 4294901760
        %862 = vmatmul.mubr.f32.gmra.mxu0 %v861
        %v863 = vpop.f32.mrf.mxu0
        %v864 = vadd.f32 %v728, %v863
        %v865 = vpop.f32.mrf.mxu0
        %866 = vmatprep.mubr.f32.mxu0 0.0
        %v867 = vand.u32 %v293, 4294901760
        %v868 = vsub.f32 %v293, %v867
        %v869 = vand.u32 %v868, 4294901760
        %870 = vmatmul.mubr.f32.gmra.mxu0 %v869
        %v871 = vpop.f32.mrf.mxu0
        %v872 = vadd.f32 %v735, %v871
        %v873 = vpop.f32.mrf.mxu0
        %874 = vdwg.mxu0
        %875 = vmatprep.subr.mxu0 0.0
        %876 = vmatpush1.msra.mxu0 0.0
        %877 = vmatprep.subr.mxu0 0.0
        %878 = vmatpush1.msra.mxu0 0.0
        %879 = vmatprep.subr.mxu0 0.0
        %880 = vmatpush1.msra.mxu0 0.0
        %881 = vmatprep.subr.mxu0 0.0
        %882 = vmatpush1.msra.mxu0 0.0
        %883 = vmatprep.subr.mxu0 0.0
        %884 = vmatpush1.msra.mxu0 0.0
        %885 = vmatprep.subr.mxu0 0.0
        %886 = vmatpush1.msra.mxu0 0.0
        %887 = vmatprep.subr.mxu0 0.0
        %888 = vmatpush1.msra.mxu0 0.0
        %889 = vmatprep.subr.mxu0 0.0
        %890 = vmatpush1.msra.mxu0 0.0
        %891 = vmatprep.subr.mxu0 0.0
        %v892 = vand.u32 %v269, 4294901760
        %v893 = vsub.f32 %v269, %v892
        %v894 = vand.u32 %v893, 4294901760
        %895 = vmatpush1.msra.mxu0 %v894
        %896 = vmatprep.subr.mxu0 0.0
        %v897 = vand.u32 %v268, 4294901760
        %v898 = vsub.f32 %v268, %v897
        %v899 = vand.u32 %v898, 4294901760
        %900 = vmatpush1.msra.mxu0 %v899
        %901 = vmatprep.subr.mxu0 0.0
        %v902 = vand.u32 %v267, 4294901760
        %v903 = vsub.f32 %v267, %v902
        %v904 = vand.u32 %v903, 4294901760
        %905 = vmatpush1.msra.mxu0 %v904
        %906 = vmatprep.subr.mxu0 0.0
        %v907 = vand.u32 %v266, 4294901760
        %v908 = vsub.f32 %v266, %v907
        %v909 = vand.u32 %v908, 4294901760
        %910 = vmatpush1.msra.mxu0 %v909
        %911 = vmatprep.subr.mxu0 0.0
        %v912 = vand.u32 %v265, 4294901760
        %v913 = vsub.f32 %v265, %v912
        %v914 = vand.u32 %v913, 4294901760
        %915 = vmatpush1.msra.mxu0 %v914
        %916 = vmatprep.subr.mxu0 0.0
        %v917 = vand.u32 %v264, 4294901760
        %v918 = vsub.f32 %v264, %v917
        %v919 = vand.u32 %v918, 4294901760
        %920 = vmatpush1.msra.mxu0 %v919
        %921 = vmatprep.subr.mxu0 0.0
        %v922 = vand.u32 %v263, 4294901760
        %v923 = vsub.f32 %v263, %v922
        %v924 = vand.u32 %v923, 4294901760
        %925 = vmatpush1.msra.mxu0 %v924
        %926 = vmatprep.subr.mxu0 0.0
        %v927 = vand.u32 %v262, 4294901760
        %v928 = vsub.f32 %v262, %v927
        %v929 = vand.u32 %v928, 4294901760
        %930 = vmatpush1.msra.mxu0 %v929
        %931 = vmatprep.subr.mxu0 0.0
        %932 = vmatpush2.msra.mxu0 0.0
        %933 = vmatprep.subr.mxu0 0.0
        %934 = vmatpush2.msra.mxu0 0.0
        %935 = vmatprep.subr.mxu0 0.0
        %936 = vmatpush2.msra.mxu0 0.0
        %937 = vmatprep.subr.mxu0 0.0
        %938 = vmatpush2.msra.mxu0 0.0
        %939 = vmatprep.subr.mxu0 0.0
        %940 = vmatpush2.msra.mxu0 0.0
        %941 = vmatprep.subr.mxu0 0.0
        %942 = vmatpush2.msra.mxu0 0.0
        %943 = vmatprep.subr.mxu0 0.0
        %944 = vmatpush2.msra.mxu0 0.0
        %945 = vmatprep.subr.mxu0 0.0
        %946 = vmatpush2.msra.mxu0 0.0
        %947 = vmatprep.subr.mxu0 0.0
        %948 = vmatpush2.msra.mxu0 0.0
        %949 = vmatprep.subr.mxu0 0.0
        %950 = vmatpush2.msra.mxu0 0.0
        %951 = vmatprep.subr.mxu0 0.0
        %952 = vmatpush2.msra.mxu0 0.0
        %953 = vmatprep.subr.mxu0 0.0
        %954 = vmatpush2.msra.mxu0 0.0
        %955 = vmatprep.subr.mxu0 0.0
        %956 = vmatpush2.msra.mxu0 0.0
        %957 = vmatprep.subr.mxu0 0.0
        %958 = vmatpush2.msra.mxu0 0.0
        %959 = vmatprep.subr.mxu0 0.0
        %960 = vmatpush2.msra.mxu0 0.0
        %961 = vmatprep.subr.mxu0 0.0
        %962 = vmatpush2.msra.mxu0 0.0
        %963 = vmatprep.mubr.f32.mxu0 0.0
        %v964 = vand.u32 %v272, 4294901760
        %965 = vmatmul.mubr.f32.gmra.mxu0 %v964
        %v966 = vpop.f32.mrf.mxu0
        %v967 = vadd.f32 %v816, %v966
        %v968 = vpop.f32.mrf.mxu0
        %969 = vmatprep.mubr.f32.mxu0 0.0
        %v970 = vand.u32 %v275, 4294901760
        %971 = vmatmul.mubr.f32.gmra.mxu0 %v970
        %v972 = vpop.f32.mrf.mxu0
        %v973 = vadd.f32 %v824, %v972
        %v974 = vpop.f32.mrf.mxu0
        %975 = vmatprep.mubr.f32.mxu0 0.0
        %v976 = vand.u32 %v278, 4294901760
        %977 = vmatmul.mubr.f32.gmra.mxu0 %v976
        %v978 = vpop.f32.mrf.mxu0
        %v979 = vadd.f32 %v832, %v978
        %v980 = vpop.f32.mrf.mxu0
        %981 = vmatprep.mubr.f32.mxu0 0.0
        %v982 = vand.u32 %v281, 4294901760
        %983 = vmatmul.mubr.f32.gmra.mxu0 %v982
        %v984 = vpop.f32.mrf.mxu0
        %v985 = vadd.f32 %v840, %v984
        %v986 = vpop.f32.mrf.mxu0
        %987 = vmatprep.mubr.f32.mxu0 0.0
        %v988 = vand.u32 %v284, 4294901760
        %989 = vmatmul.mubr.f32.gmra.mxu0 %v988
        %v990 = vpop.f32.mrf.mxu0
        %v991 = vadd.f32 %v848, %v990
        %v992 = vpop.f32.mrf.mxu0
        %993 = vmatprep.mubr.f32.mxu0 0.0
        %v994 = vand.u32 %v287, 4294901760
        %995 = vmatmul.mubr.f32.gmra.mxu0 %v994
        %v996 = vpop.f32.mrf.mxu0
        %v997 = vadd.f32 %v856, %v996
        %v998 = vpop.f32.mrf.mxu0
        %999 = vmatprep.mubr.f32.mxu0 0.0
        %v1000 = vand.u32 %v290, 4294901760
        %1001 = vmatmul.mubr.f32.gmra.mxu0 %v1000
        %v1002 = vpop.f32.mrf.mxu0
        %v1003 = vadd.f32 %v864, %v1002
        %v1004 = vpop.f32.mrf.mxu0
        %1005 = vmatprep.mubr.f32.mxu0 0.0
        %v1006 = vand.u32 %v293, 4294901760
        %1007 = vmatmul.mubr.f32.gmra.mxu0 %v1006
        %v1008 = vpop.f32.mrf.mxu0
        %v1009 = vadd.f32 %v872, %v1008
        %v1010 = vpop.f32.mrf.mxu0
        %1011 = vdwg.mxu0
        %1012 = vmatprep.subr.mxu0 0.0
        %1013 = vmatpush1.msra.mxu0 0.0
        %1014 = vmatprep.subr.mxu0 0.0
        %1015 = vmatpush1.msra.mxu0 0.0
        %1016 = vmatprep.subr.mxu0 0.0
        %1017 = vmatpush1.msra.mxu0 0.0
        %1018 = vmatprep.subr.mxu0 0.0
        %1019 = vmatpush1.msra.mxu0 0.0
        %1020 = vmatprep.subr.mxu0 0.0
        %1021 = vmatpush1.msra.mxu0 0.0
        %1022 = vmatprep.subr.mxu0 0.0
        %1023 = vmatpush1.msra.mxu0 0.0
        %1024 = vmatprep.subr.mxu0 0.0
        %1025 = vmatpush1.msra.mxu0 0.0
        %1026 = vmatprep.subr.mxu0 0.0
        %1027 = vmatpush1.msra.mxu0 0.0
        %1028 = vmatprep.subr.mxu0 0.0
        %v1029 = vand.u32 %v269, 4294901760
        %1030 = vmatpush1.msra.mxu0 %v1029
        %1031 = vmatprep.subr.mxu0 0.0
        %v1032 = vand.u32 %v268, 4294901760
        %1033 = vmatpush1.msra.mxu0 %v1032
        %1034 = vmatprep.subr.mxu0 0.0
        %v1035 = vand.u32 %v267, 4294901760
        %1036 = vmatpush1.msra.mxu0 %v1035
        %1037 = vmatprep.subr.mxu0 0.0
        %v1038 = vand.u32 %v266, 4294901760
        %1039 = vmatpush1.msra.mxu0 %v1038
        %1040 = vmatprep.subr.mxu0 0.0
        %v1041 = vand.u32 %v265, 4294901760
        %1042 = vmatpush1.msra.mxu0 %v1041
        %1043 = vmatprep.subr.mxu0 0.0
        %v1044 = vand.u32 %v264, 4294901760
        %1045 = vmatpush1.msra.mxu0 %v1044
        %1046 = vmatprep.subr.mxu0 0.0
        %v1047 = vand.u32 %v263, 4294901760
        %1048 = vmatpush1.msra.mxu0 %v1047
        %1049 = vmatprep.subr.mxu0 0.0
        %v1050 = vand.u32 %v262, 4294901760
        %1051 = vmatpush1.msra.mxu0 %v1050
        %1052 = vmatprep.subr.mxu0 0.0
        %1053 = vmatpush2.msra.mxu0 0.0
        %1054 = vmatprep.subr.mxu0 0.0
        %1055 = vmatpush2.msra.mxu0 0.0
        %1056 = vmatprep.subr.mxu0 0.0
        %1057 = vmatpush2.msra.mxu0 0.0
        %1058 = vmatprep.subr.mxu0 0.0
        %1059 = vmatpush2.msra.mxu0 0.0
        %1060 = vmatprep.subr.mxu0 0.0
        %1061 = vmatpush2.msra.mxu0 0.0
        %1062 = vmatprep.subr.mxu0 0.0
        %1063 = vmatpush2.msra.mxu0 0.0
        %1064 = vmatprep.subr.mxu0 0.0
        %1065 = vmatpush2.msra.mxu0 0.0
        %1066 = vmatprep.subr.mxu0 0.0
        %1067 = vmatpush2.msra.mxu0 0.0
        %1068 = vmatprep.subr.mxu0 0.0
        %1069 = vmatpush2.msra.mxu0 0.0
        %1070 = vmatprep.subr.mxu0 0.0
        %1071 = vmatpush2.msra.mxu0 0.0
        %1072 = vmatprep.subr.mxu0 0.0
        %1073 = vmatpush2.msra.mxu0 0.0
        %1074 = vmatprep.subr.mxu0 0.0
        %1075 = vmatpush2.msra.mxu0 0.0
        %1076 = vmatprep.subr.mxu0 0.0
        %1077 = vmatpush2.msra.mxu0 0.0
        %1078 = vmatprep.subr.mxu0 0.0
        %1079 = vmatpush2.msra.mxu0 0.0
        %1080 = vmatprep.subr.mxu0 0.0
        %1081 = vmatpush2.msra.mxu0 0.0
        %1082 = vmatprep.subr.mxu0 0.0
        %1083 = vmatpush2.msra.mxu0 0.0
        %1084 = vmatprep.mubr.f32.mxu0 0.0
        %v1085 = vand.u32 %v272, 4294901760
        %1086 = vmatmul.mubr.f32.gmra.mxu0 %v1085
        %v1087 = vpop.f32.mrf.mxu0
        %v1088 = vadd.f32 %v967, %v1087
        %v1089 = vpop.f32.mrf.mxu0
        %1090 = vmatprep.mubr.f32.mxu0 0.0
        %v1091 = vand.u32 %v275, 4294901760
        %1092 = vmatmul.mubr.f32.gmra.mxu0 %v1091
        %v1093 = vpop.f32.mrf.mxu0
        %v1094 = vadd.f32 %v973, %v1093
        %v1095 = vpop.f32.mrf.mxu0
        %1096 = vmatprep.mubr.f32.mxu0 0.0
        %v1097 = vand.u32 %v278, 4294901760
        %1098 = vmatmul.mubr.f32.gmra.mxu0 %v1097
        %v1099 = vpop.f32.mrf.mxu0
        %v1100 = vadd.f32 %v979, %v1099
        %v1101 = vpop.f32.mrf.mxu0
        %1102 = vmatprep.mubr.f32.mxu0 0.0
        %v1103 = vand.u32 %v281, 4294901760
        %1104 = vmatmul.mubr.f32.gmra.mxu0 %v1103
        %v1105 = vpop.f32.mrf.mxu0
        %v1106 = vadd.f32 %v985, %v1105
        %v1107 = vpop.f32.mrf.mxu0
        %1108 = vmatprep.mubr.f32.mxu0 0.0
        %v1109 = vand.u32 %v284, 4294901760
        %1110 = vmatmul.mubr.f32.gmra.mxu0 %v1109
        %v1111 = vpop.f32.mrf.mxu0
        %v1112 = vadd.f32 %v991, %v1111
        %v1113 = vpop.f32.mrf.mxu0
        %1114 = vmatprep.mubr.f32.mxu0 0.0
        %v1115 = vand.u32 %v287, 4294901760
        %1116 = vmatmul.mubr.f32.gmra.mxu0 %v1115
        %v1117 = vpop.f32.mrf.mxu0
        %v1118 = vadd.f32 %v997, %v1117
        %v1119 = vpop.f32.mrf.mxu0
        %1120 = vmatprep.mubr.f32.mxu0 0.0
        %v1121 = vand.u32 %v290, 4294901760
        %1122 = vmatmul.mubr.f32.gmra.mxu0 %v1121
        %v1123 = vpop.f32.mrf.mxu0
        %v1124 = vadd.f32 %v1003, %v1123
        %v1125 = vpop.f32.mrf.mxu0
        %1126 = vmatprep.mubr.f32.mxu0 0.0
        %v1127 = vand.u32 %v293, 4294901760
        %1128 = vmatmul.mubr.f32.gmra.mxu0 %v1127
        %v1129 = vpop.f32.mrf.mxu0
        %v1130 = vadd.f32 %v1009, %v1129
        %v1131 = vpop.f32.mrf.mxu0
        %1132 = vdwg.mxu0
        %v1134 = vsel %vm270, %v138, 0
        %v1137 = vsel %vm270, %v139, 0
        %v1140 = vsel %vm270, %v140, 0
        %v1143 = vsel %vm270, %v141, 0
        %v1146 = vsel %vm270, %v142, 0
        %v1149 = vsel %vm270, %v143, 0
        %v1152 = vsel %vm270, %v144, 0
        %v1155 = vsel %vm270, %v145, 0
        %1157 = vmatprep.subr.mxu0 0.0
        %1158 = vmatpush1.msra.mxu0 0.0
        %1159 = vmatprep.subr.mxu0 0.0
        %1160 = vmatpush1.msra.mxu0 0.0
        %1161 = vmatprep.subr.mxu0 0.0
        %1162 = vmatpush1.msra.mxu0 0.0
        %1163 = vmatprep.subr.mxu0 0.0
        %1164 = vmatpush1.msra.mxu0 0.0
        %1165 = vmatprep.subr.mxu0 0.0
        %1166 = vmatpush1.msra.mxu0 0.0
        %1167 = vmatprep.subr.mxu0 0.0
        %1168 = vmatpush1.msra.mxu0 0.0
        %1169 = vmatprep.subr.mxu0 0.0
        %1170 = vmatpush1.msra.mxu0 0.0
        %1171 = vmatprep.subr.mxu0 0.0
        %1172 = vmatpush1.msra.mxu0 0.0
        %1173 = vmatprep.subr.mxu0 0.0
        %v1174 = vand.u32 %v237, 4294901760
        %1175 = vmatpush1.msra.mxu0 %v1174
        %1176 = vmatprep.subr.mxu0 0.0
        %v1177 = vand.u32 %v236, 4294901760
        %1178 = vmatpush1.msra.mxu0 %v1177
        %1179 = vmatprep.subr.mxu0 0.0
        %v1180 = vand.u32 %v235, 4294901760
        %1181 = vmatpush1.msra.mxu0 %v1180
        %1182 = vmatprep.subr.mxu0 0.0
        %v1183 = vand.u32 %v234, 4294901760
        %1184 = vmatpush1.msra.mxu0 %v1183
        %1185 = vmatprep.subr.mxu0 0.0
        %v1186 = vand.u32 %v233, 4294901760
        %1187 = vmatpush1.msra.mxu0 %v1186
        %1188 = vmatprep.subr.mxu0 0.0
        %v1189 = vand.u32 %v232, 4294901760
        %1190 = vmatpush1.msra.mxu0 %v1189
        %1191 = vmatprep.subr.mxu0 0.0
        %v1192 = vand.u32 %v231, 4294901760
        %1193 = vmatpush1.msra.mxu0 %v1192
        %1194 = vmatprep.subr.mxu0 0.0
        %v1195 = vand.u32 %v230, 4294901760
        %1196 = vmatpush1.msra.mxu0 %v1195
        %1197 = vmatprep.subr.mxu0 0.0
        %1198 = vmatpush2.msra.mxu0 0.0
        %1199 = vmatprep.subr.mxu0 0.0
        %1200 = vmatpush2.msra.mxu0 0.0
        %1201 = vmatprep.subr.mxu0 0.0
        %1202 = vmatpush2.msra.mxu0 0.0
        %1203 = vmatprep.subr.mxu0 0.0
        %1204 = vmatpush2.msra.mxu0 0.0
        %1205 = vmatprep.subr.mxu0 0.0
        %1206 = vmatpush2.msra.mxu0 0.0
        %1207 = vmatprep.subr.mxu0 0.0
        %1208 = vmatpush2.msra.mxu0 0.0
        %1209 = vmatprep.subr.mxu0 0.0
        %1210 = vmatpush2.msra.mxu0 0.0
        %1211 = vmatprep.subr.mxu0 0.0
        %1212 = vmatpush2.msra.mxu0 0.0
        %1213 = vmatprep.subr.mxu0 0.0
        %1214 = vmatpush2.msra.mxu0 0.0
        %1215 = vmatprep.subr.mxu0 0.0
        %1216 = vmatpush2.msra.mxu0 0.0
        %1217 = vmatprep.subr.mxu0 0.0
        %1218 = vmatpush2.msra.mxu0 0.0
        %1219 = vmatprep.subr.mxu0 0.0
        %1220 = vmatpush2.msra.mxu0 0.0
        %1221 = vmatprep.subr.mxu0 0.0
        %1222 = vmatpush2.msra.mxu0 0.0
        %1223 = vmatprep.subr.mxu0 0.0
        %1224 = vmatpush2.msra.mxu0 0.0
        %1225 = vmatprep.subr.mxu0 0.0
        %1226 = vmatpush2.msra.mxu0 0.0
        %1227 = vmatprep.subr.mxu0 0.0
        %1228 = vmatpush2.msra.mxu0 0.0
        %1229 = vmatprep.mubr.f32.mxu0 0.0
        %v1230 = vand.u32 %v1134, 4294901760
        %v1231 = vsub.f32 %v1134, %v1230
        %v1232 = vand.u32 %v1231, 4294901760
        %v1233 = vsub.f32 %v1231, %v1232
        %v1234 = vand.u32 %v1233, 4294901760
        %1235 = vmatmul.mubr.f32.gmra.mxu0 %v1234
        %v1236 = vpop.f32.mrf.mxu0
        %v1237 = vadd.f32 %v1088, %v1236
        %v1238 = vpop.f32.mrf.mxu0
        %1239 = vmatprep.mubr.f32.mxu0 0.0
        %v1240 = vand.u32 %v1137, 4294901760
        %v1241 = vsub.f32 %v1137, %v1240
        %v1242 = vand.u32 %v1241, 4294901760
        %v1243 = vsub.f32 %v1241, %v1242
        %v1244 = vand.u32 %v1243, 4294901760
        %1245 = vmatmul.mubr.f32.gmra.mxu0 %v1244
        %v1246 = vpop.f32.mrf.mxu0
        %v1247 = vadd.f32 %v1094, %v1246
        %v1248 = vpop.f32.mrf.mxu0
        %1249 = vmatprep.mubr.f32.mxu0 0.0
        %v1250 = vand.u32 %v1140, 4294901760
        %v1251 = vsub.f32 %v1140, %v1250
        %v1252 = vand.u32 %v1251, 4294901760
        %v1253 = vsub.f32 %v1251, %v1252
        %v1254 = vand.u32 %v1253, 4294901760
        %1255 = vmatmul.mubr.f32.gmra.mxu0 %v1254
        %v1256 = vpop.f32.mrf.mxu0
        %v1257 = vadd.f32 %v1100, %v1256
        %v1258 = vpop.f32.mrf.mxu0
        %1259 = vmatprep.mubr.f32.mxu0 0.0
        %v1260 = vand.u32 %v1143, 4294901760
        %v1261 = vsub.f32 %v1143, %v1260
        %v1262 = vand.u32 %v1261, 4294901760
        %v1263 = vsub.f32 %v1261, %v1262
        %v1264 = vand.u32 %v1263, 4294901760
        %1265 = vmatmul.mubr.f32.gmra.mxu0 %v1264
        %v1266 = vpop.f32.mrf.mxu0
        %v1267 = vadd.f32 %v1106, %v1266
        %v1268 = vpop.f32.mrf.mxu0
        %1269 = vmatprep.mubr.f32.mxu0 0.0
        %v1270 = vand.u32 %v1146, 4294901760
        %v1271 = vsub.f32 %v1146, %v1270
        %v1272 = vand.u32 %v1271, 4294901760
        %v1273 = vsub.f32 %v1271, %v1272
        %v1274 = vand.u32 %v1273, 4294901760
        %1275 = vmatmul.mubr.f32.gmra.mxu0 %v1274
        %v1276 = vpop.f32.mrf.mxu0
        %v1277 = vadd.f32 %v1112, %v1276
        %v1278 = vpop.f32.mrf.mxu0
        %1279 = vmatprep.mubr.f32.mxu0 0.0
        %v1280 = vand.u32 %v1149, 4294901760
        %v1281 = vsub.f32 %v1149, %v1280
        %v1282 = vand.u32 %v1281, 4294901760
        %v1283 = vsub.f32 %v1281, %v1282
        %v1284 = vand.u32 %v1283, 4294901760
        %1285 = vmatmul.mubr.f32.gmra.mxu0 %v1284
        %v1286 = vpop.f32.mrf.mxu0
        %v1287 = vadd.f32 %v1118, %v1286
        %v1288 = vpop.f32.mrf.mxu0
        %1289 = vmatprep.mubr.f32.mxu0 0.0
        %v1290 = vand.u32 %v1152, 4294901760
        %v1291 = vsub.f32 %v1152, %v1290
        %v1292 = vand.u32 %v1291, 4294901760
        %v1293 = vsub.f32 %v1291, %v1292
        %v1294 = vand.u32 %v1293, 4294901760
        %1295 = vmatmul.mubr.f32.gmra.mxu0 %v1294
        %v1296 = vpop.f32.mrf.mxu0
        %v1297 = vadd.f32 %v1124, %v1296
        %v1298 = vpop.f32.mrf.mxu0
        %1299 = vmatprep.mubr.f32.mxu0 0.0
        %v1300 = vand.u32 %v1155, 4294901760
        %v1301 = vsub.f32 %v1155, %v1300
        %v1302 = vand.u32 %v1301, 4294901760
        %v1303 = vsub.f32 %v1301, %v1302
        %v1304 = vand.u32 %v1303, 4294901760
        %1305 = vmatmul.mubr.f32.gmra.mxu0 %v1304
        %v1306 = vpop.f32.mrf.mxu0
        %v1307 = vadd.f32 %v1130, %v1306
        %v1308 = vpop.f32.mrf.mxu0
        %1309 = vdwg.mxu0
        %1310 = vmatprep.subr.mxu0 0.0
        %1311 = vmatpush1.msra.mxu0 0.0
        %1312 = vmatprep.subr.mxu0 0.0
        %1313 = vmatpush1.msra.mxu0 0.0
        %1314 = vmatprep.subr.mxu0 0.0
        %1315 = vmatpush1.msra.mxu0 0.0
        %1316 = vmatprep.subr.mxu0 0.0
        %1317 = vmatpush1.msra.mxu0 0.0
        %1318 = vmatprep.subr.mxu0 0.0
        %1319 = vmatpush1.msra.mxu0 0.0
        %1320 = vmatprep.subr.mxu0 0.0
        %1321 = vmatpush1.msra.mxu0 0.0
        %1322 = vmatprep.subr.mxu0 0.0
        %1323 = vmatpush1.msra.mxu0 0.0
        %1324 = vmatprep.subr.mxu0 0.0
        %1325 = vmatpush1.msra.mxu0 0.0
        %1326 = vmatprep.subr.mxu0 0.0
        %v1327 = vand.u32 %v237, 4294901760
        %v1328 = vsub.f32 %v237, %v1327
        %v1329 = vand.u32 %v1328, 4294901760
        %v1330 = vsub.f32 %v1328, %v1329
        %v1331 = vand.u32 %v1330, 4294901760
        %1332 = vmatpush1.msra.mxu0 %v1331
        %1333 = vmatprep.subr.mxu0 0.0
        %v1334 = vand.u32 %v236, 4294901760
        %v1335 = vsub.f32 %v236, %v1334
        %v1336 = vand.u32 %v1335, 4294901760
        %v1337 = vsub.f32 %v1335, %v1336
        %v1338 = vand.u32 %v1337, 4294901760
        %1339 = vmatpush1.msra.mxu0 %v1338
        %1340 = vmatprep.subr.mxu0 0.0
        %v1341 = vand.u32 %v235, 4294901760
        %v1342 = vsub.f32 %v235, %v1341
        %v1343 = vand.u32 %v1342, 4294901760
        %v1344 = vsub.f32 %v1342, %v1343
        %v1345 = vand.u32 %v1344, 4294901760
        %1346 = vmatpush1.msra.mxu0 %v1345
        %1347 = vmatprep.subr.mxu0 0.0
        %v1348 = vand.u32 %v234, 4294901760
        %v1349 = vsub.f32 %v234, %v1348
        %v1350 = vand.u32 %v1349, 4294901760
        %v1351 = vsub.f32 %v1349, %v1350
        %v1352 = vand.u32 %v1351, 4294901760
        %1353 = vmatpush1.msra.mxu0 %v1352
        %1354 = vmatprep.subr.mxu0 0.0
        %v1355 = vand.u32 %v233, 4294901760
        %v1356 = vsub.f32 %v233, %v1355
        %v1357 = vand.u32 %v1356, 4294901760
        %v1358 = vsub.f32 %v1356, %v1357
        %v1359 = vand.u32 %v1358, 4294901760
        %1360 = vmatpush1.msra.mxu0 %v1359
        %1361 = vmatprep.subr.mxu0 0.0
        %v1362 = vand.u32 %v232, 4294901760
        %v1363 = vsub.f32 %v232, %v1362
        %v1364 = vand.u32 %v1363, 4294901760
        %v1365 = vsub.f32 %v1363, %v1364
        %v1366 = vand.u32 %v1365, 4294901760
        %1367 = vmatpush1.msra.mxu0 %v1366
        %1368 = vmatprep.subr.mxu0 0.0
        %v1369 = vand.u32 %v231, 4294901760
        %v1370 = vsub.f32 %v231, %v1369
        %v1371 = vand.u32 %v1370, 4294901760
        %v1372 = vsub.f32 %v1370, %v1371
        %v1373 = vand.u32 %v1372, 4294901760
        %1374 = vmatpush1.msra.mxu0 %v1373
        %1375 = vmatprep.subr.mxu0 0.0
        %v1376 = vand.u32 %v230, 4294901760
        %v1377 = vsub.f32 %v230, %v1376
        %v1378 = vand.u32 %v1377, 4294901760
        %v1379 = vsub.f32 %v1377, %v1378
        %v1380 = vand.u32 %v1379, 4294901760
        %1381 = vmatpush1.msra.mxu0 %v1380
        %1382 = vmatprep.subr.mxu0 0.0
        %1383 = vmatpush2.msra.mxu0 0.0
        %1384 = vmatprep.subr.mxu0 0.0
        %1385 = vmatpush2.msra.mxu0 0.0
        %1386 = vmatprep.subr.mxu0 0.0
        %1387 = vmatpush2.msra.mxu0 0.0
        %1388 = vmatprep.subr.mxu0 0.0
        %1389 = vmatpush2.msra.mxu0 0.0
        %1390 = vmatprep.subr.mxu0 0.0
        %1391 = vmatpush2.msra.mxu0 0.0
        %1392 = vmatprep.subr.mxu0 0.0
        %1393 = vmatpush2.msra.mxu0 0.0
        %1394 = vmatprep.subr.mxu0 0.0
        %1395 = vmatpush2.msra.mxu0 0.0
        %1396 = vmatprep.subr.mxu0 0.0
        %1397 = vmatpush2.msra.mxu0 0.0
        %1398 = vmatprep.subr.mxu0 0.0
        %1399 = vmatpush2.msra.mxu0 0.0
        %1400 = vmatprep.subr.mxu0 0.0
        %1401 = vmatpush2.msra.mxu0 0.0
        %1402 = vmatprep.subr.mxu0 0.0
        %1403 = vmatpush2.msra.mxu0 0.0
        %1404 = vmatprep.subr.mxu0 0.0
        %1405 = vmatpush2.msra.mxu0 0.0
        %1406 = vmatprep.subr.mxu0 0.0
        %1407 = vmatpush2.msra.mxu0 0.0
        %1408 = vmatprep.subr.mxu0 0.0
        %1409 = vmatpush2.msra.mxu0 0.0
        %1410 = vmatprep.subr.mxu0 0.0
        %1411 = vmatpush2.msra.mxu0 0.0
        %1412 = vmatprep.subr.mxu0 0.0
        %1413 = vmatpush2.msra.mxu0 0.0
        %1414 = vmatprep.mubr.f32.mxu0 0.0
        %v1415 = vand.u32 %v1134, 4294901760
        %1416 = vmatmul.mubr.f32.gmra.mxu0 %v1415
        %v1417 = vpop.f32.mrf.mxu0
        %v1418 = vadd.f32 %v1237, %v1417
        %v1419 = vpop.f32.mrf.mxu0
        %1420 = vmatprep.mubr.f32.mxu0 0.0
        %v1421 = vand.u32 %v1137, 4294901760
        %1422 = vmatmul.mubr.f32.gmra.mxu0 %v1421
        %v1423 = vpop.f32.mrf.mxu0
        %v1424 = vadd.f32 %v1247, %v1423
        %v1425 = vpop.f32.mrf.mxu0
        %1426 = vmatprep.mubr.f32.mxu0 0.0
        %v1427 = vand.u32 %v1140, 4294901760
        %1428 = vmatmul.mubr.f32.gmra.mxu0 %v1427
        %v1429 = vpop.f32.mrf.mxu0
        %v1430 = vadd.f32 %v1257, %v1429
        %v1431 = vpop.f32.mrf.mxu0
        %1432 = vmatprep.mubr.f32.mxu0 0.0
        %v1433 = vand.u32 %v1143, 4294901760
        %1434 = vmatmul.mubr.f32.gmra.mxu0 %v1433
        %v1435 = vpop.f32.mrf.mxu0
        %v1436 = vadd.f32 %v1267, %v1435
        %v1437 = vpop.f32.mrf.mxu0
        %1438 = vmatprep.mubr.f32.mxu0 0.0
        %v1439 = vand.u32 %v1146, 4294901760
        %1440 = vmatmul.mubr.f32.gmra.mxu0 %v1439
        %v1441 = vpop.f32.mrf.mxu0
        %v1442 = vadd.f32 %v1277, %v1441
        %v1443 = vpop.f32.mrf.mxu0
        %1444 = vmatprep.mubr.f32.mxu0 0.0
        %v1445 = vand.u32 %v1149, 4294901760
        %1446 = vmatmul.mubr.f32.gmra.mxu0 %v1445
        %v1447 = vpop.f32.mrf.mxu0
        %v1448 = vadd.f32 %v1287, %v1447
        %v1449 = vpop.f32.mrf.mxu0
        %1450 = vmatprep.mubr.f32.mxu0 0.0
        %v1451 = vand.u32 %v1152, 4294901760
        %1452 = vmatmul.mubr.f32.gmra.mxu0 %v1451
        %v1453 = vpop.f32.mrf.mxu0
        %v1454 = vadd.f32 %v1297, %v1453
        %v1455 = vpop.f32.mrf.mxu0
        %1456 = vmatprep.mubr.f32.mxu0 0.0
        %v1457 = vand.u32 %v1155, 4294901760
        %1458 = vmatmul.mubr.f32.gmra.mxu0 %v1457
        %v1459 = vpop.f32.mrf.mxu0
        %v1460 = vadd.f32 %v1307, %v1459
        %v1461 = vpop.f32.mrf.mxu0
        %1462 = vdwg.mxu0
        %1463 = vmatprep.subr.mxu0 0.0
        %1464 = vmatpush1.msra.mxu0 0.0
        %1465 = vmatprep.subr.mxu0 0.0
        %1466 = vmatpush1.msra.mxu0 0.0
        %1467 = vmatprep.subr.mxu0 0.0
        %1468 = vmatpush1.msra.mxu0 0.0
        %1469 = vmatprep.subr.mxu0 0.0
        %1470 = vmatpush1.msra.mxu0 0.0
        %1471 = vmatprep.subr.mxu0 0.0
        %1472 = vmatpush1.msra.mxu0 0.0
        %1473 = vmatprep.subr.mxu0 0.0
        %1474 = vmatpush1.msra.mxu0 0.0
        %1475 = vmatprep.subr.mxu0 0.0
        %1476 = vmatpush1.msra.mxu0 0.0
        %1477 = vmatprep.subr.mxu0 0.0
        %1478 = vmatpush1.msra.mxu0 0.0
        %1479 = vmatprep.subr.mxu0 0.0
        %v1480 = vand.u32 %v237, 4294901760
        %v1481 = vsub.f32 %v237, %v1480
        %1482 = vmatpush1.msra.mxu0 %v1481
        %1483 = vmatprep.subr.mxu0 0.0
        %v1484 = vand.u32 %v236, 4294901760
        %v1485 = vsub.f32 %v236, %v1484
        %1486 = vmatpush1.msra.mxu0 %v1485
        %1487 = vmatprep.subr.mxu0 0.0
        %v1488 = vand.u32 %v235, 4294901760
        %v1489 = vsub.f32 %v235, %v1488
        %1490 = vmatpush1.msra.mxu0 %v1489
        %1491 = vmatprep.subr.mxu0 0.0
        %v1492 = vand.u32 %v234, 4294901760
        %v1493 = vsub.f32 %v234, %v1492
        %1494 = vmatpush1.msra.mxu0 %v1493
        %1495 = vmatprep.subr.mxu0 0.0
        %v1496 = vand.u32 %v233, 4294901760
        %v1497 = vsub.f32 %v233, %v1496
        %1498 = vmatpush1.msra.mxu0 %v1497
        %1499 = vmatprep.subr.mxu0 0.0
        %v1500 = vand.u32 %v232, 4294901760
        %v1501 = vsub.f32 %v232, %v1500
        %1502 = vmatpush1.msra.mxu0 %v1501
        %1503 = vmatprep.subr.mxu0 0.0
        %v1504 = vand.u32 %v231, 4294901760
        %v1505 = vsub.f32 %v231, %v1504
        %1506 = vmatpush1.msra.mxu0 %v1505
        %1507 = vmatprep.subr.mxu0 0.0
        %v1508 = vand.u32 %v230, 4294901760
        %v1509 = vsub.f32 %v230, %v1508
        %1510 = vmatpush1.msra.mxu0 %v1509
        %1511 = vmatprep.subr.mxu0 0.0
        %1512 = vmatpush2.msra.mxu0 0.0
        %1513 = vmatprep.subr.mxu0 0.0
        %1514 = vmatpush2.msra.mxu0 0.0
        %1515 = vmatprep.subr.mxu0 0.0
        %1516 = vmatpush2.msra.mxu0 0.0
        %1517 = vmatprep.subr.mxu0 0.0
        %1518 = vmatpush2.msra.mxu0 0.0
        %1519 = vmatprep.subr.mxu0 0.0
        %1520 = vmatpush2.msra.mxu0 0.0
        %1521 = vmatprep.subr.mxu0 0.0
        %1522 = vmatpush2.msra.mxu0 0.0
        %1523 = vmatprep.subr.mxu0 0.0
        %1524 = vmatpush2.msra.mxu0 0.0
        %1525 = vmatprep.subr.mxu0 0.0
        %1526 = vmatpush2.msra.mxu0 0.0
        %1527 = vmatprep.subr.mxu0 0.0
        %1528 = vmatpush2.msra.mxu0 0.0
        %1529 = vmatprep.subr.mxu0 0.0
        %1530 = vmatpush2.msra.mxu0 0.0
        %1531 = vmatprep.subr.mxu0 0.0
        %1532 = vmatpush2.msra.mxu0 0.0
        %1533 = vmatprep.subr.mxu0 0.0
        %1534 = vmatpush2.msra.mxu0 0.0
        %1535 = vmatprep.subr.mxu0 0.0
        %1536 = vmatpush2.msra.mxu0 0.0
        %1537 = vmatprep.subr.mxu0 0.0
        %1538 = vmatpush2.msra.mxu0 0.0
        %1539 = vmatprep.subr.mxu0 0.0
        %1540 = vmatpush2.msra.mxu0 0.0
        %1541 = vmatprep.subr.mxu0 0.0
        %1542 = vmatpush2.msra.mxu0 0.0
        %1543 = vmatprep.mubr.f32.mxu0 0.0
        %v1544 = vand.u32 %v1134, 4294901760
        %v1545 = vsub.f32 %v1134, %v1544
        %1546 = vmatmul.mubr.f32.gmra.mxu0 %v1545
        %v1547 = vpop.f32.mrf.mxu0
        %v1548 = vadd.f32 %v1418, %v1547
        %v1549 = vpop.f32.mrf.mxu0
        %1550 = vmatprep.mubr.f32.mxu0 0.0
        %v1551 = vand.u32 %v1137, 4294901760
        %v1552 = vsub.f32 %v1137, %v1551
        %1553 = vmatmul.mubr.f32.gmra.mxu0 %v1552
        %v1554 = vpop.f32.mrf.mxu0
        %v1555 = vadd.f32 %v1424, %v1554
        %v1556 = vpop.f32.mrf.mxu0
        %1557 = vmatprep.mubr.f32.mxu0 0.0
        %v1558 = vand.u32 %v1140, 4294901760
        %v1559 = vsub.f32 %v1140, %v1558
        %1560 = vmatmul.mubr.f32.gmra.mxu0 %v1559
        %v1561 = vpop.f32.mrf.mxu0
        %v1562 = vadd.f32 %v1430, %v1561
        %v1563 = vpop.f32.mrf.mxu0
        %1564 = vmatprep.mubr.f32.mxu0 0.0
        %v1565 = vand.u32 %v1143, 4294901760
        %v1566 = vsub.f32 %v1143, %v1565
        %1567 = vmatmul.mubr.f32.gmra.mxu0 %v1566
        %v1568 = vpop.f32.mrf.mxu0
        %v1569 = vadd.f32 %v1436, %v1568
        %v1570 = vpop.f32.mrf.mxu0
        %1571 = vmatprep.mubr.f32.mxu0 0.0
        %v1572 = vand.u32 %v1146, 4294901760
        %v1573 = vsub.f32 %v1146, %v1572
        %1574 = vmatmul.mubr.f32.gmra.mxu0 %v1573
        %v1575 = vpop.f32.mrf.mxu0
        %v1576 = vadd.f32 %v1442, %v1575
        %v1577 = vpop.f32.mrf.mxu0
        %1578 = vmatprep.mubr.f32.mxu0 0.0
        %v1579 = vand.u32 %v1149, 4294901760
        %v1580 = vsub.f32 %v1149, %v1579
        %1581 = vmatmul.mubr.f32.gmra.mxu0 %v1580
        %v1582 = vpop.f32.mrf.mxu0
        %v1583 = vadd.f32 %v1448, %v1582
        %v1584 = vpop.f32.mrf.mxu0
        %1585 = vmatprep.mubr.f32.mxu0 0.0
        %v1586 = vand.u32 %v1152, 4294901760
        %v1587 = vsub.f32 %v1152, %v1586
        %1588 = vmatmul.mubr.f32.gmra.mxu0 %v1587
        %v1589 = vpop.f32.mrf.mxu0
        %v1590 = vadd.f32 %v1454, %v1589
        %v1591 = vpop.f32.mrf.mxu0
        %1592 = vmatprep.mubr.f32.mxu0 0.0
        %v1593 = vand.u32 %v1155, 4294901760
        %v1594 = vsub.f32 %v1155, %v1593
        %1595 = vmatmul.mubr.f32.gmra.mxu0 %v1594
        %v1596 = vpop.f32.mrf.mxu0
        %v1597 = vadd.f32 %v1460, %v1596
        %v1598 = vpop.f32.mrf.mxu0
        %1599 = vdwg.mxu0
        %1600 = vmatprep.subr.mxu0 0.0
        %1601 = vmatpush1.msra.mxu0 0.0
        %1602 = vmatprep.subr.mxu0 0.0
        %1603 = vmatpush1.msra.mxu0 0.0
        %1604 = vmatprep.subr.mxu0 0.0
        %1605 = vmatpush1.msra.mxu0 0.0
        %1606 = vmatprep.subr.mxu0 0.0
        %1607 = vmatpush1.msra.mxu0 0.0
        %1608 = vmatprep.subr.mxu0 0.0
        %1609 = vmatpush1.msra.mxu0 0.0
        %1610 = vmatprep.subr.mxu0 0.0
        %1611 = vmatpush1.msra.mxu0 0.0
        %1612 = vmatprep.subr.mxu0 0.0
        %1613 = vmatpush1.msra.mxu0 0.0
        %1614 = vmatprep.subr.mxu0 0.0
        %1615 = vmatpush1.msra.mxu0 0.0
        %1616 = vmatprep.subr.mxu0 0.0
        %v1617 = vand.u32 %v237, 4294901760
        %1618 = vmatpush1.msra.mxu0 %v1617
        %1619 = vmatprep.subr.mxu0 0.0
        %v1620 = vand.u32 %v236, 4294901760
        %1621 = vmatpush1.msra.mxu0 %v1620
        %1622 = vmatprep.subr.mxu0 0.0
        %v1623 = vand.u32 %v235, 4294901760
        %1624 = vmatpush1.msra.mxu0 %v1623
        %1625 = vmatprep.subr.mxu0 0.0
        %v1626 = vand.u32 %v234, 4294901760
        %1627 = vmatpush1.msra.mxu0 %v1626
        %1628 = vmatprep.subr.mxu0 0.0
        %v1629 = vand.u32 %v233, 4294901760
        %1630 = vmatpush1.msra.mxu0 %v1629
        %1631 = vmatprep.subr.mxu0 0.0
        %v1632 = vand.u32 %v232, 4294901760
        %1633 = vmatpush1.msra.mxu0 %v1632
        %1634 = vmatprep.subr.mxu0 0.0
        %v1635 = vand.u32 %v231, 4294901760
        %1636 = vmatpush1.msra.mxu0 %v1635
        %1637 = vmatprep.subr.mxu0 0.0
        %v1638 = vand.u32 %v230, 4294901760
        %1639 = vmatpush1.msra.mxu0 %v1638
        %1640 = vmatprep.subr.mxu0 0.0
        %1641 = vmatpush2.msra.mxu0 0.0
        %1642 = vmatprep.subr.mxu0 0.0
        %1643 = vmatpush2.msra.mxu0 0.0
        %1644 = vmatprep.subr.mxu0 0.0
        %1645 = vmatpush2.msra.mxu0 0.0
        %1646 = vmatprep.subr.mxu0 0.0
        %1647 = vmatpush2.msra.mxu0 0.0
        %1648 = vmatprep.subr.mxu0 0.0
        %1649 = vmatpush2.msra.mxu0 0.0
        %1650 = vmatprep.subr.mxu0 0.0
        %1651 = vmatpush2.msra.mxu0 0.0
        %1652 = vmatprep.subr.mxu0 0.0
        %1653 = vmatpush2.msra.mxu0 0.0
        %1654 = vmatprep.subr.mxu0 0.0
        %1655 = vmatpush2.msra.mxu0 0.0
        %1656 = vmatprep.subr.mxu0 0.0
        %1657 = vmatpush2.msra.mxu0 0.0
        %1658 = vmatprep.subr.mxu0 0.0
        %1659 = vmatpush2.msra.mxu0 0.0
        %1660 = vmatprep.subr.mxu0 0.0
        %1661 = vmatpush2.msra.mxu0 0.0
        %1662 = vmatprep.subr.mxu0 0.0
        %1663 = vmatpush2.msra.mxu0 0.0
        %1664 = vmatprep.subr.mxu0 0.0
        %1665 = vmatpush2.msra.mxu0 0.0
        %1666 = vmatprep.subr.mxu0 0.0
        %1667 = vmatpush2.msra.mxu0 0.0
        %1668 = vmatprep.subr.mxu0 0.0
        %1669 = vmatpush2.msra.mxu0 0.0
        %1670 = vmatprep.subr.mxu0 0.0
        %1671 = vmatpush2.msra.mxu0 0.0
        %1672 = vmatprep.mubr.f32.mxu0 0.0
        %v1673 = vand.u32 %v1134, 4294901760
        %v1674 = vsub.f32 %v1134, %v1673
        %v1675 = vand.u32 %v1674, 4294901760
        %1676 = vmatmul.mubr.f32.gmra.mxu0 %v1675
        %v1677 = vpop.f32.mrf.mxu0
        %v1678 = vadd.f32 %v1548, %v1677
        %v1679 = vpop.f32.mrf.mxu0
        %1680 = vmatprep.mubr.f32.mxu0 0.0
        %v1681 = vand.u32 %v1137, 4294901760
        %v1682 = vsub.f32 %v1137, %v1681
        %v1683 = vand.u32 %v1682, 4294901760
        %1684 = vmatmul.mubr.f32.gmra.mxu0 %v1683
        %v1685 = vpop.f32.mrf.mxu0
        %v1686 = vadd.f32 %v1555, %v1685
        %v1687 = vpop.f32.mrf.mxu0
        %1688 = vmatprep.mubr.f32.mxu0 0.0
        %v1689 = vand.u32 %v1140, 4294901760
        %v1690 = vsub.f32 %v1140, %v1689
        %v1691 = vand.u32 %v1690, 4294901760
        %1692 = vmatmul.mubr.f32.gmra.mxu0 %v1691
        %v1693 = vpop.f32.mrf.mxu0
        %v1694 = vadd.f32 %v1562, %v1693
        %v1695 = vpop.f32.mrf.mxu0
        %1696 = vmatprep.mubr.f32.mxu0 0.0
        %v1697 = vand.u32 %v1143, 4294901760
        %v1698 = vsub.f32 %v1143, %v1697
        %v1699 = vand.u32 %v1698, 4294901760
        %1700 = vmatmul.mubr.f32.gmra.mxu0 %v1699
        %v1701 = vpop.f32.mrf.mxu0
        %v1702 = vadd.f32 %v1569, %v1701
        %v1703 = vpop.f32.mrf.mxu0
        %1704 = vmatprep.mubr.f32.mxu0 0.0
        %v1705 = vand.u32 %v1146, 4294901760
        %v1706 = vsub.f32 %v1146, %v1705
        %v1707 = vand.u32 %v1706, 4294901760
        %1708 = vmatmul.mubr.f32.gmra.mxu0 %v1707
        %v1709 = vpop.f32.mrf.mxu0
        %v1710 = vadd.f32 %v1576, %v1709
        %v1711 = vpop.f32.mrf.mxu0
        %1712 = vmatprep.mubr.f32.mxu0 0.0
        %v1713 = vand.u32 %v1149, 4294901760
        %v1714 = vsub.f32 %v1149, %v1713
        %v1715 = vand.u32 %v1714, 4294901760
        %1716 = vmatmul.mubr.f32.gmra.mxu0 %v1715
        %v1717 = vpop.f32.mrf.mxu0
        %v1718 = vadd.f32 %v1583, %v1717
        %v1719 = vpop.f32.mrf.mxu0
        %1720 = vmatprep.mubr.f32.mxu0 0.0
        %v1721 = vand.u32 %v1152, 4294901760
        %v1722 = vsub.f32 %v1152, %v1721
        %v1723 = vand.u32 %v1722, 4294901760
        %1724 = vmatmul.mubr.f32.gmra.mxu0 %v1723
        %v1725 = vpop.f32.mrf.mxu0
        %v1726 = vadd.f32 %v1590, %v1725
        %v1727 = vpop.f32.mrf.mxu0
        %1728 = vmatprep.mubr.f32.mxu0 0.0
        %v1729 = vand.u32 %v1155, 4294901760
        %v1730 = vsub.f32 %v1155, %v1729
        %v1731 = vand.u32 %v1730, 4294901760
        %1732 = vmatmul.mubr.f32.gmra.mxu0 %v1731
        %v1733 = vpop.f32.mrf.mxu0
        %v1734 = vadd.f32 %v1597, %v1733
        %v1735 = vpop.f32.mrf.mxu0
        %1736 = vdwg.mxu0
        %1737 = vmatprep.subr.mxu0 0.0
        %1738 = vmatpush1.msra.mxu0 0.0
        %1739 = vmatprep.subr.mxu0 0.0
        %1740 = vmatpush1.msra.mxu0 0.0
        %1741 = vmatprep.subr.mxu0 0.0
        %1742 = vmatpush1.msra.mxu0 0.0
        %1743 = vmatprep.subr.mxu0 0.0
        %1744 = vmatpush1.msra.mxu0 0.0
        %1745 = vmatprep.subr.mxu0 0.0
        %1746 = vmatpush1.msra.mxu0 0.0
        %1747 = vmatprep.subr.mxu0 0.0
        %1748 = vmatpush1.msra.mxu0 0.0
        %1749 = vmatprep.subr.mxu0 0.0
        %1750 = vmatpush1.msra.mxu0 0.0
        %1751 = vmatprep.subr.mxu0 0.0
        %1752 = vmatpush1.msra.mxu0 0.0
        %1753 = vmatprep.subr.mxu0 0.0
        %v1754 = vand.u32 %v237, 4294901760
        %v1755 = vsub.f32 %v237, %v1754
        %v1756 = vand.u32 %v1755, 4294901760
        %1757 = vmatpush1.msra.mxu0 %v1756
        %1758 = vmatprep.subr.mxu0 0.0
        %v1759 = vand.u32 %v236, 4294901760
        %v1760 = vsub.f32 %v236, %v1759
        %v1761 = vand.u32 %v1760, 4294901760
        %1762 = vmatpush1.msra.mxu0 %v1761
        %1763 = vmatprep.subr.mxu0 0.0
        %v1764 = vand.u32 %v235, 4294901760
        %v1765 = vsub.f32 %v235, %v1764
        %v1766 = vand.u32 %v1765, 4294901760
        %1767 = vmatpush1.msra.mxu0 %v1766
        %1768 = vmatprep.subr.mxu0 0.0
        %v1769 = vand.u32 %v234, 4294901760
        %v1770 = vsub.f32 %v234, %v1769
        %v1771 = vand.u32 %v1770, 4294901760
        %1772 = vmatpush1.msra.mxu0 %v1771
        %1773 = vmatprep.subr.mxu0 0.0
        %v1774 = vand.u32 %v233, 4294901760
        %v1775 = vsub.f32 %v233, %v1774
        %v1776 = vand.u32 %v1775, 4294901760
        %1777 = vmatpush1.msra.mxu0 %v1776
        %1778 = vmatprep.subr.mxu0 0.0
        %v1779 = vand.u32 %v232, 4294901760
        %v1780 = vsub.f32 %v232, %v1779
        %v1781 = vand.u32 %v1780, 4294901760
        %1782 = vmatpush1.msra.mxu0 %v1781
        %1783 = vmatprep.subr.mxu0 0.0
        %v1784 = vand.u32 %v231, 4294901760
        %v1785 = vsub.f32 %v231, %v1784
        %v1786 = vand.u32 %v1785, 4294901760
        %1787 = vmatpush1.msra.mxu0 %v1786
        %1788 = vmatprep.subr.mxu0 0.0
        %v1789 = vand.u32 %v230, 4294901760
        %v1790 = vsub.f32 %v230, %v1789
        %v1791 = vand.u32 %v1790, 4294901760
        %1792 = vmatpush1.msra.mxu0 %v1791
        %1793 = vmatprep.subr.mxu0 0.0
        %1794 = vmatpush2.msra.mxu0 0.0
        %1795 = vmatprep.subr.mxu0 0.0
        %1796 = vmatpush2.msra.mxu0 0.0
        %1797 = vmatprep.subr.mxu0 0.0
        %1798 = vmatpush2.msra.mxu0 0.0
        %1799 = vmatprep.subr.mxu0 0.0
        %1800 = vmatpush2.msra.mxu0 0.0
        %1801 = vmatprep.subr.mxu0 0.0
        %1802 = vmatpush2.msra.mxu0 0.0
        %1803 = vmatprep.subr.mxu0 0.0
        %1804 = vmatpush2.msra.mxu0 0.0
        %1805 = vmatprep.subr.mxu0 0.0
        %1806 = vmatpush2.msra.mxu0 0.0
        %1807 = vmatprep.subr.mxu0 0.0
        %1808 = vmatpush2.msra.mxu0 0.0
        %1809 = vmatprep.subr.mxu0 0.0
        %1810 = vmatpush2.msra.mxu0 0.0
        %1811 = vmatprep.subr.mxu0 0.0
        %1812 = vmatpush2.msra.mxu0 0.0
        %1813 = vmatprep.subr.mxu0 0.0
        %1814 = vmatpush2.msra.mxu0 0.0
        %1815 = vmatprep.subr.mxu0 0.0
        %1816 = vmatpush2.msra.mxu0 0.0
        %1817 = vmatprep.subr.mxu0 0.0
        %1818 = vmatpush2.msra.mxu0 0.0
        %1819 = vmatprep.subr.mxu0 0.0
        %1820 = vmatpush2.msra.mxu0 0.0
        %1821 = vmatprep.subr.mxu0 0.0
        %1822 = vmatpush2.msra.mxu0 0.0
        %1823 = vmatprep.subr.mxu0 0.0
        %1824 = vmatpush2.msra.mxu0 0.0
        %1825 = vmatprep.mubr.f32.mxu0 0.0
        %v1826 = vand.u32 %v1134, 4294901760
        %1827 = vmatmul.mubr.f32.gmra.mxu0 %v1826
        %v1828 = vpop.f32.mrf.mxu0
        %v1829 = vadd.f32 %v1678, %v1828
        %v1830 = vpop.f32.mrf.mxu0
        %1831 = vmatprep.mubr.f32.mxu0 0.0
        %v1832 = vand.u32 %v1137, 4294901760
        %1833 = vmatmul.mubr.f32.gmra.mxu0 %v1832
        %v1834 = vpop.f32.mrf.mxu0
        %v1835 = vadd.f32 %v1686, %v1834
        %v1836 = vpop.f32.mrf.mxu0
        %1837 = vmatprep.mubr.f32.mxu0 0.0
        %v1838 = vand.u32 %v1140, 4294901760
        %1839 = vmatmul.mubr.f32.gmra.mxu0 %v1838
        %v1840 = vpop.f32.mrf.mxu0
        %v1841 = vadd.f32 %v1694, %v1840
        %v1842 = vpop.f32.mrf.mxu0
        %1843 = vmatprep.mubr.f32.mxu0 0.0
        %v1844 = vand.u32 %v1143, 4294901760
        %1845 = vmatmul.mubr.f32.gmra.mxu0 %v1844
        %v1846 = vpop.f32.mrf.mxu0
        %v1847 = vadd.f32 %v1702, %v1846
        %v1848 = vpop.f32.mrf.mxu0
        %1849 = vmatprep.mubr.f32.mxu0 0.0
        %v1850 = vand.u32 %v1146, 4294901760
        %1851 = vmatmul.mubr.f32.gmra.mxu0 %v1850
        %v1852 = vpop.f32.mrf.mxu0
        %v1853 = vadd.f32 %v1710, %v1852
        %v1854 = vpop.f32.mrf.mxu0
        %1855 = vmatprep.mubr.f32.mxu0 0.0
        %v1856 = vand.u32 %v1149, 4294901760
        %1857 = vmatmul.mubr.f32.gmra.mxu0 %v1856
        %v1858 = vpop.f32.mrf.mxu0
        %v1859 = vadd.f32 %v1718, %v1858
        %v1860 = vpop.f32.mrf.mxu0
        %1861 = vmatprep.mubr.f32.mxu0 0.0
        %v1862 = vand.u32 %v1152, 4294901760
        %1863 = vmatmul.mubr.f32.gmra.mxu0 %v1862
        %v1864 = vpop.f32.mrf.mxu0
        %v1865 = vadd.f32 %v1726, %v1864
        %v1866 = vpop.f32.mrf.mxu0
        %1867 = vmatprep.mubr.f32.mxu0 0.0
        %v1868 = vand.u32 %v1155, 4294901760
        %1869 = vmatmul.mubr.f32.gmra.mxu0 %v1868
        %v1870 = vpop.f32.mrf.mxu0
        %v1871 = vadd.f32 %v1734, %v1870
        %v1872 = vpop.f32.mrf.mxu0
        %1873 = vdwg.mxu0
        %1874 = vmatprep.subr.mxu0 0.0
        %1875 = vmatpush1.msra.mxu0 0.0
        %1876 = vmatprep.subr.mxu0 0.0
        %1877 = vmatpush1.msra.mxu0 0.0
        %1878 = vmatprep.subr.mxu0 0.0
        %1879 = vmatpush1.msra.mxu0 0.0
        %1880 = vmatprep.subr.mxu0 0.0
        %1881 = vmatpush1.msra.mxu0 0.0
        %1882 = vmatprep.subr.mxu0 0.0
        %1883 = vmatpush1.msra.mxu0 0.0
        %1884 = vmatprep.subr.mxu0 0.0
        %1885 = vmatpush1.msra.mxu0 0.0
        %1886 = vmatprep.subr.mxu0 0.0
        %1887 = vmatpush1.msra.mxu0 0.0
        %1888 = vmatprep.subr.mxu0 0.0
        %1889 = vmatpush1.msra.mxu0 0.0
        %1890 = vmatprep.subr.mxu0 0.0
        %v1891 = vand.u32 %v237, 4294901760
        %1892 = vmatpush1.msra.mxu0 %v1891
        %1893 = vmatprep.subr.mxu0 0.0
        %v1894 = vand.u32 %v236, 4294901760
        %1895 = vmatpush1.msra.mxu0 %v1894
        %1896 = vmatprep.subr.mxu0 0.0
        %v1897 = vand.u32 %v235, 4294901760
        %1898 = vmatpush1.msra.mxu0 %v1897
        %1899 = vmatprep.subr.mxu0 0.0
        %v1900 = vand.u32 %v234, 4294901760
        %1901 = vmatpush1.msra.mxu0 %v1900
        %1902 = vmatprep.subr.mxu0 0.0
        %v1903 = vand.u32 %v233, 4294901760
        %1904 = vmatpush1.msra.mxu0 %v1903
        %1905 = vmatprep.subr.mxu0 0.0
        %v1906 = vand.u32 %v232, 4294901760
        %1907 = vmatpush1.msra.mxu0 %v1906
        %1908 = vmatprep.subr.mxu0 0.0
        %v1909 = vand.u32 %v231, 4294901760
        %1910 = vmatpush1.msra.mxu0 %v1909
        %1911 = vmatprep.subr.mxu0 0.0
        %v1912 = vand.u32 %v230, 4294901760
        %1913 = vmatpush1.msra.mxu0 %v1912
        %1914 = vmatprep.subr.mxu0 0.0
        %1915 = vmatpush2.msra.mxu0 0.0
        %1916 = vmatprep.subr.mxu0 0.0
        %1917 = vmatpush2.msra.mxu0 0.0
        %1918 = vmatprep.subr.mxu0 0.0
        %1919 = vmatpush2.msra.mxu0 0.0
        %1920 = vmatprep.subr.mxu0 0.0
        %1921 = vmatpush2.msra.mxu0 0.0
        %1922 = vmatprep.subr.mxu0 0.0
        %1923 = vmatpush2.msra.mxu0 0.0
        %1924 = vmatprep.subr.mxu0 0.0
        %1925 = vmatpush2.msra.mxu0 0.0
        %1926 = vmatprep.subr.mxu0 0.0
        %1927 = vmatpush2.msra.mxu0 0.0
        %1928 = vmatprep.subr.mxu0 0.0
        %1929 = vmatpush2.msra.mxu0 0.0
        %1930 = vmatprep.subr.mxu0 0.0
        %1931 = vmatpush2.msra.mxu0 0.0
        %1932 = vmatprep.subr.mxu0 0.0
        %1933 = vmatpush2.msra.mxu0 0.0
        %1934 = vmatprep.subr.mxu0 0.0
        %1935 = vmatpush2.msra.mxu0 0.0
        %1936 = vmatprep.subr.mxu0 0.0
        %1937 = vmatpush2.msra.mxu0 0.0
        %1938 = vmatprep.subr.mxu0 0.0
        %1939 = vmatpush2.msra.mxu0 0.0
        %1940 = vmatprep.subr.mxu0 0.0
        %1941 = vmatpush2.msra.mxu0 0.0
        %1942 = vmatprep.subr.mxu0 0.0
        %1943 = vmatpush2.msra.mxu0 0.0
        %1944 = vmatprep.subr.mxu0 0.0
        %1945 = vmatpush2.msra.mxu0 0.0
        %1946 = vmatprep.mubr.f32.mxu0 0.0
        %v1947 = vand.u32 %v1134, 4294901760
        %1948 = vmatmul.mubr.f32.gmra.mxu0 %v1947
        %v1949 = vpop.f32.mrf.mxu0
        %v1950 = vadd.f32 %v1829, %v1949
        %v1951 = vpop.f32.mrf.mxu0
        %1952 = vmatprep.mubr.f32.mxu0 0.0
        %v1953 = vand.u32 %v1137, 4294901760
        %1954 = vmatmul.mubr.f32.gmra.mxu0 %v1953
        %v1955 = vpop.f32.mrf.mxu0
        %v1956 = vadd.f32 %v1835, %v1955
        %v1957 = vpop.f32.mrf.mxu0
        %1958 = vmatprep.mubr.f32.mxu0 0.0
        %v1959 = vand.u32 %v1140, 4294901760
        %1960 = vmatmul.mubr.f32.gmra.mxu0 %v1959
        %v1961 = vpop.f32.mrf.mxu0
        %v1962 = vadd.f32 %v1841, %v1961
        %v1963 = vpop.f32.mrf.mxu0
        %1964 = vmatprep.mubr.f32.mxu0 0.0
        %v1965 = vand.u32 %v1143, 4294901760
        %1966 = vmatmul.mubr.f32.gmra.mxu0 %v1965
        %v1967 = vpop.f32.mrf.mxu0
        %v1968 = vadd.f32 %v1847, %v1967
        %v1969 = vpop.f32.mrf.mxu0
        %1970 = vmatprep.mubr.f32.mxu0 0.0
        %v1971 = vand.u32 %v1146, 4294901760
        %1972 = vmatmul.mubr.f32.gmra.mxu0 %v1971
        %v1973 = vpop.f32.mrf.mxu0
        %v1974 = vadd.f32 %v1853, %v1973
        %v1975 = vpop.f32.mrf.mxu0
        %1976 = vmatprep.mubr.f32.mxu0 0.0
        %v1977 = vand.u32 %v1149, 4294901760
        %1978 = vmatmul.mubr.f32.gmra.mxu0 %v1977
        %v1979 = vpop.f32.mrf.mxu0
        %v1980 = vadd.f32 %v1859, %v1979
        %v1981 = vpop.f32.mrf.mxu0
        %1982 = vmatprep.mubr.f32.mxu0 0.0
        %v1983 = vand.u32 %v1152, 4294901760
        %1984 = vmatmul.mubr.f32.gmra.mxu0 %v1983
        %v1985 = vpop.f32.mrf.mxu0
        %v1986 = vadd.f32 %v1865, %v1985
        %v1987 = vpop.f32.mrf.mxu0
        %1988 = vmatprep.mubr.f32.mxu0 0.0
        %v1989 = vand.u32 %v1155, 4294901760
        %1990 = vmatmul.mubr.f32.gmra.mxu0 %v1989
        %v1991 = vpop.f32.mrf.mxu0
        %v1992 = vadd.f32 %v1871, %v1991
        %v1993 = vpop.f32.mrf.mxu0
        %1994 = vdwg.mxu0
        %1995 = vst [vmem:[%s135] sm:$0xff] %v1950
        %1996 = vst [vmem:[%s135 + $0x8] sm:$0xff] %v1956
        %1997 = vst [vmem:[%s135 + $0x10] sm:$0xff] %v1962
        %1998 = vst [vmem:[%s135 + $0x18] sm:$0xff] %v1968
        %1999 = vst [vmem:[%s135 + $0x20] sm:$0xff] %v1974
        %2000 = vst [vmem:[%s135 + $0x28] sm:$0xff] %v1980
        %2001 = vst [vmem:[%s135 + $0x30] sm:$0xff] %v1986
        %2002 = vst [vmem:[%s135 + $0x38] sm:$0xff] %v1992
        %s2003 = sand.u32 %s52, 1
        %s2004 = scalar_lea.sflag [#allocation4], %s2003
        %s2005 = sand.u32 %s52, 1
        %s2006 = smul.addr %s2005, 64
        %s2007 = scalar_lea.vmem [#allocation5], %s2006
        // Predicated region
        $region29: #{tpu_custom_call.1} parent=23 // pred_check
          %p2008 = pneg %p62
        $region30: #{tpu_custom_call.1} parent=23 // pred_check_branch
          %2010 = sbr.rel (%p2008) target = $region32
        $region31: #{tpu_custom_call.1} parent=23 // pred_region
          %s2011 = smul.u32 8, %s18
          %s2013 = ssub.s32 1024, 1024
          %2014 = vsyncadd %s2004, %s2013
          %s2015 = smul.addr %s2011, 128
          %s2016 = scalar_lea.hbm %s1, %s2015
          %s2017 = sshll.u32 %s2007, 4
          %s2018 = int_to_ptr.vmem [resolvable:$true] %s2017
          %2023 = dma.vmem_to_hbm [thread:$0]  %s2018, 1024, %s2016, %s2004, 128, 128, 8
        $region32: #{tpu_custom_call.1} parent=23 // pred_fallthru
          _
      $region24: #{tpu_custom_call.1} parent=5 // pred_fallthru
        _
      %p2024 = scmp.le.s32.totalorder 2, %s13
      // Predicated region
      $region33: #{tpu_custom_call.1} parent=5 // pred_check
        %p2025 = pneg %p2024
      $region34: #{tpu_custom_call.1} parent=5 // pred_check_branch
        %2027 = sbr.rel (%p2025) target = $region36
      $region35: #{tpu_custom_call.1} parent=5 // pred_region
        %s2028 = ssub.s32 %s13, 2
        // Predicated region
        $region37: #{tpu_custom_call.1} parent=35 // pred_check
          %p2029 = pneg %p68
        $region38: #{tpu_custom_call.1} parent=35 // pred_check_branch
          %2031 = sbr.rel (%p2029) target = $region40
        $region39: #{tpu_custom_call.1} parent=35 // pred_region
          %s2032 = sand.u32 %s53, 1
          %s2033 = scalar_lea.sflag [#allocation4], %s2032
          %s2034 = sand.u32 %s53, 1
          %s2035 = smul.addr %s2034, 64
          %s2036 = scalar_lea.vmem [#allocation5], %s2035
          %2037 = dma.done %s2033, 1024
        $region40: #{tpu_custom_call.1} parent=35 // pred_fallthru
          _
      $region36: #{tpu_custom_call.1} parent=5 // pred_fallthru
        _
    $region6: #{tpu_custom_call.1} parent=1 // loop_footer
      %s17 = sadd.s32 1, %s13
    $region7: #{tpu_custom_call.1} parent=1 // loop_footer_branch
      %12 = sbr.rel target = $region3
    $region8: #{tpu_custom_call.1} parent=1 // loop_exit
      _
    %2038 = vsyncpa [#allocation3], 1
    %s2039 = scalar_lea.sflag [#allocation3], 1
    %2040 = vsyncpa %s2039, 1
    %2041 = vsyncpa [#allocation4], 1
    %s2042 = scalar_lea.sflag [#allocation4], 1
    %2043 = vsyncpa %s2042, 1

</llo_original>
